<compile_context>
chip_gen: v5e
topology: v5e:2x2
jax: 0.10.0
libtpu: 0.0.40
codegen_flags: <defaults>
</compile_context>

<pallas_src>
import functools

import jax
import jax.numpy as jnp
from jax import lax
from jax.experimental import pallas as pl
from jax.experimental.pallas import tpu as pltpu

BN_EPS = 1e-5
LEAKY_SLOPE = 0.2


def _round_up(x, m):
    return (x + m - 1) // m * m


def _conv_stats_kernel(w_ref, xf_ref, mask_ref, conv_ref, stats_ref, *, tap_offsets, lw):
    """Pass 1: fused conv (tap-accumulated MXU matmuls) + per-batch BN partial stats.

    w_ref:     (T, TC, Cin)   per-tap weight matrices for this Cout tile (resident)
    xf_ref:    (Cin, Lf)      zero-padded, flattened input image of this batch element (resident)
    mask_ref:  (1, Lw)        1.0 on valid output columns, 0.0 on wrap-around / garbage columns
    conv_ref:  (TC, Lw)       "wide" conv output tile (lane-dense store)
    stats_ref: (2, TC, 1)     this (batch, cout-tile)'s [sum, sum(x*x)] over valid columns
    """
    acc = jnp.zeros(conv_ref.shape, jnp.float32)
    for t, off in enumerate(tap_offsets):          # static unroll: KH*KW small matmuls
        acc = acc + jnp.dot(w_ref[t], xf_ref[:, off:off + lw],
                            preferred_element_type=jnp.float32)
    conv_ref[...] = acc.astype(conv_ref.dtype)
    accm = acc * mask_ref[...]                     # zero out wrap-around columns for the stats
    stats_ref[0] = jnp.sum(accm, axis=1, keepdims=True)
    stats_ref[1] = jnp.sum(accm * accm, axis=1, keepdims=True)


def _bn_act_kernel(scale_ref, shift_ref, conv_ref, o_ref, *, ow):
    """Pass 2: folded BatchNorm (y = x*scale + shift) + LeakyReLU(0.2), exact-shape store."""
    y = conv_ref[...].astype(jnp.float32) * scale_ref[...] + shift_ref[...]
    y = jnp.maximum(y, LEAKY_SLOPE * y)
    o_ref[...] = y[:, :, :ow].astype(o_ref.dtype)  # drop the wrap-around columns (no-op if ow==Wp)


def conv_block(x, weight, bias, gamma, beta, stride, padding, *, input_dtype=None):
    """x: (N, Cin, H, W) f32, weight: (Cout, Cin, KH, KW) (PyTorch layouts). Returns NCHW f32."""
    del bias  # cancelled exactly by the batch-mean subtraction of train-mode BatchNorm
    n, cin, h, w = x.shape
    cout, _, kh, kw = weight.shape
    oh = (h + 2 * padding - kh) // stride + 1
    ow = (w + 2 * padding - kw) // stride + 1

    if stride == 1:
        # --- fused tap path: no im2col, no 9x HBM inflation -------------------------------
        hp, wp = h + 2 * padding, w + 2 * padding
        lw = oh * wp                               # wide flat output length (row stride wp)
        lf = _round_up(hp * wp + kw - 1, 128)      # flat input + tail so all tap reads stay in bounds
        xf = jnp.pad(x, ((0, 0), (0, 0), (padding, padding), (padding, padding)))
        xf = xf.reshape(n, cin, hp * wp)
        xf = jnp.pad(xf, ((0, 0), (0, 0), (0, lf - hp * wp)))
        tap_offsets = tuple(ky * wp + kx for ky in range(kh) for kx in range(kw))
        w_taps = jnp.transpose(weight, (2, 3, 0, 1)).reshape(kh * kw, cout, cin)
        cin_eff, wp_eff = cin, wp
        col = jnp.arange(lw, dtype=jnp.int32) % wp
        mask = (col < ow).astype(jnp.float32).reshape(1, lw)
    else:
        # --- fallback for stride != 1: XLA im2col feeding the same kernels (single tap) ---
        # TODO(synk): replace with in-kernel phase-decimated tap accumulation for stride>1.
        k = cin * kh * kw
        patches = lax.conv_general_dilated_patches(
            x, (kh, kw), (stride, stride),
            padding=((padding, padding), (padding, padding)),
            dimension_numbers=("NCHW", "OIHW", "NCHW"))          # (N, K, OH, OW), K=(cin,ky,kx)
        lw = oh * ow
        lf = _round_up(lw, 128)
        xf = jnp.pad(patches.reshape(n, k, lw), ((0, 0), (0, 0), (0, lf - lw)))
        tap_offsets = (0,)
        w_taps = weight.reshape(1, cout, k)
        cin_eff, wp_eff = k, ow
        mask = jnp.ones((1, lw), jnp.float32)

    compute_dtype = jnp.float32 if input_dtype is None else input_dtype
    xf = xf.astype(compute_dtype)
    w_taps = w_taps.astype(compute_dtype)
    conv_dtype = compute_dtype                     # bf16 flag also halves the intermediate stream
    ntaps = len(tap_offsets)

    # Cout tiling: MXU-native tiles when Cout is large; single full tile otherwise.
    if cout % 256 == 0:
        tc = 256
    elif cout % 128 == 0:
        tc = 128
    else:
        tc = cout
    nct = cout // tc

    # ---- Pass 1: fused conv + per-batch BN partial stats (both grid axes parallel) --------
    conv_wide, stats = pl.pallas_call(
        functools.partial(_conv_stats_kernel, tap_offsets=tap_offsets, lw=lw),
        out_shape=(jax.ShapeDtypeStruct((n, cout, lw), conv_dtype),
                   jax.ShapeDtypeStruct((n, 2, cout, 1), jnp.float32)),
        grid_spec=pltpu.PrefetchScalarGridSpec(
            num_scalar_prefetch=0,
            grid=(n, nct),
            in_specs=[
                pl.BlockSpec((ntaps, tc, cin_eff), lambda b, j: (0, j, 0)),
                pl.BlockSpec((None, cin_eff, lf), lambda b, j: (b, 0, 0)),   # resident per batch
                pl.BlockSpec((1, lw), lambda b, j: (0, 0)),
            ],
            out_specs=[
                pl.BlockSpec((None, tc, lw), lambda b, j: (b, j, 0)),
                pl.BlockSpec((None, 2, tc, 1), lambda b, j: (b, 0, j, 0)),   # per-batch partials
            ],
        ),
        compiler_params=pltpu.CompilerParams(
            dimension_semantics=("parallel", "parallel")),
    )(w_taps, xf, mask)

    # ---- Fold train-mode BN into per-channel scale/shift (tiny XLA work) -------------------
    m_real = jnp.float32(n * oh * ow)
    s = jnp.sum(stats[:, 0, :, 0], axis=0)
    sq = jnp.sum(stats[:, 1, :, 0], axis=0)
    mean = s / m_real
    var = jnp.maximum(sq / m_real - mean * mean, 0.0)
    inv_std = lax.rsqrt(var + BN_EPS)
    g = gamma.astype(jnp.float32)
    scale = (g * inv_std).reshape(cout, 1, 1)
    shift = (beta.astype(jnp.float32) - mean * g * inv_std).reshape(cout, 1, 1)

    # ---- Pass 2: normalize + LeakyReLU, write the exact NCHW output directly ---------------
    conv4 = conv_wide.reshape(n, cout, oh, wp_eff)   # free reshape: lw == oh * wp_eff exactly
    out = pl.pallas_call(
        functools.partial(_bn_act_kernel, ow=ow),
        out_shape=jax.ShapeDtypeStruct((n, cout, oh, ow), jnp.float32),
        grid_spec=pltpu.PrefetchScalarGridSpec(
            num_scalar_prefetch=0,
            grid=(n,),
            in_specs=[
                pl.BlockSpec((cout, 1, 1), lambda b: (0, 0, 0)),
                pl.BlockSpec((cout, 1, 1), lambda b: (0, 0, 0)),
                pl.BlockSpec((None, cout, oh, wp_eff), lambda b: (b, 0, 0, 0)),
            ],
            out_specs=pl.BlockSpec((None, cout, oh, ow), lambda b: (b, 0, 0, 0)),
        ),
        compiler_params=pltpu.CompilerParams(
            dimension_semantics=("parallel",)),
    )(scale, shift, conv4)
    return out


def reference_conv_block(x, weight, bias, gamma, beta, stride, padding):
    """Pure-JAX reference (lax.conv + bias + train-mode BN + LeakyReLU), NCHW."""
    y = lax.conv_general_dilated(
        x, weight, window_strides=(stride, stride),
        padding=((padding, padding), (padding, padding)),
        dimension_numbers=("NCHW", "OIHW", "NCHW"))
    y = y + bias.reshape(1, -1, 1, 1)
    mean = jnp.mean(y, axis=(0, 2, 3), keepdims=True)
    var = jnp.mean((y - mean) ** 2, axis=(0, 2, 3), keepdims=True)
    y = (y - mean) * lax.rsqrt(var + BN_EPS)
    y = y * gamma.reshape(1, -1, 1, 1) + beta.reshape(1, -1, 1, 1)
    return jnp.where(y >= 0, y, LEAKY_SLOPE * y)


if __name__ == "__main__":
    # ConvBlock(in_channels=4, out_channels=8, kernel_size=3, stride=1, padding=1, bias=True)
    N, CIN, H, W = 2, 4, 16, 16
    COUT, KH, KW = 8, 3, 3
    STRIDE, PADDING = 1, 1

    key = jax.random.PRNGKey(0)
    kx, kw_, kb, kg, kbe = jax.random.split(key, 5)
    x = jax.random.normal(kx, (N, CIN, H, W), dtype=jnp.float32)
    fan_in = CIN * KH * KW
    weight = jax.random.normal(kw_, (COUT, CIN, KH, KW), dtype=jnp.float32) / jnp.sqrt(fan_in)
    bias = jax.random.normal(kb, (COUT,), dtype=jnp.float32) * 0.1
    gamma = 1.0 + 0.1 * jax.random.normal(kg, (COUT,), dtype=jnp.float32)
    beta = 0.1 * jax.random.normal(kbe, (COUT,), dtype=jnp.float32)

    fn = jax.jit(functools.partial(conv_block, stride=STRIDE, padding=PADDING))
    out = jax.block_until_ready(fn(x, weight, bias, gamma, beta))

    ref = reference_conv_block(x, weight, bias, gamma, beta, STRIDE, PADDING)
    assert out.shape == (N, COUT, H, W), out.shape
    max_err = float(jnp.max(jnp.abs(out - ref)))
    assert jnp.allclose(out, ref, atol=1e-4, rtol=1e-4), max_err
    print("KERNEL_OK")
</pallas_src>

<mosaic_0001>
module attributes {stable_mosaic.version = 11 : i64} {
  func.func @_conv_stats_kernel(%arg0: i32, %arg1: i32, %arg2: memref<9x8x4xf32, #tpu.memory_space<vmem>>, %arg3: memref<1x4x384xf32, #tpu.memory_space<vmem>>, %arg4: memref<1x288xf32, #tpu.memory_space<vmem>>, %arg5: memref<1x8x288xf32, #tpu.memory_space<vmem>>, %arg6: memref<1x2x8x1xf32, #tpu.memory_space<vmem>>) attributes {dimension_semantics = [#tpu.dimension_semantics<parallel>, #tpu.dimension_semantics<parallel>], iteration_bounds = array<i64: 2, 1>, scalar_prefetch = 0 : i64, scratch_operands = 0 : i64, tpu.core_type = #tpu.core_type<tc>, window_params = [{transform_indices = @transform_0, window_bounds = array<i64: 9, 8, 4>}, {transform_indices = @transform_1, window_bounds = array<i64: 1, 4, 384>}, {pipeline_mode = #tpu.pipeline_mode<synchronous>, transform_indices = @transform_2, window_bounds = array<i64: 1, 288>}, {transform_indices = @transform_3, window_bounds = array<i64: 1, 8, 288>}, {transform_indices = @transform_4, window_bounds = array<i64: 1, 2, 8, 1>}]} {
    %cst = arith.constant 0.000000e+00 : f32
    %0 = vector.broadcast %cst : f32 to vector<8x288xf32>
    %c0 = arith.constant 0 : index
    %c0_0 = arith.constant 0 : index
    %c0_1 = arith.constant 0 : index
    %1 = vector.load %arg2[%c0, %c0_0, %c0_1] : memref<9x8x4xf32, #tpu.memory_space<vmem>>, vector<1x8x4xf32>
    %2 = vector.shape_cast %1 : vector<1x8x4xf32> to vector<8x4xf32>
    %c0_2 = arith.constant 0 : index
    %c0_3 = arith.constant 0 : index
    %c0_4 = arith.constant 0 : index
    %3 = vector.load %arg3[%c0_2, %c0_3, %c0_4] : memref<1x4x384xf32, #tpu.memory_space<vmem>>, vector<1x4x288xf32>
    %4 = vector.shape_cast %3 : vector<1x4x288xf32> to vector<4x288xf32>
    %cst_5 = arith.constant dense<0.000000e+00> : vector<8x288xf32>
    %5 = tpu.matmul %2, %4, %cst_5 {dimension_numbers = #tpu.dot_dimension_numbers<[1], [0], [0], [1], [0, 0, 1, 1], [], []>} : vector<8x4xf32>, vector<4x288xf32>, vector<8x288xf32> -> vector<8x288xf32>
    %6 = arith.addf %0, %5 : vector<8x288xf32>
    %c1 = arith.constant 1 : index
    %c0_6 = arith.constant 0 : index
    %c0_7 = arith.constant 0 : index
    %7 = vector.load %arg2[%c1, %c0_6, %c0_7] : memref<9x8x4xf32, #tpu.memory_space<vmem>>, vector<1x8x4xf32>
    %8 = vector.shape_cast %7 : vector<1x8x4xf32> to vector<8x4xf32>
    %c0_8 = arith.constant 0 : index
    %c0_9 = arith.constant 0 : index
    %c1_10 = arith.constant 1 : index
    %9 = vector.load %arg3[%c0_8, %c0_9, %c1_10] : memref<1x4x384xf32, #tpu.memory_space<vmem>>, vector<1x4x288xf32>
    %10 = vector.shape_cast %9 : vector<1x4x288xf32> to vector<4x288xf32>
    %cst_11 = arith.constant dense<0.000000e+00> : vector<8x288xf32>
    %11 = tpu.matmul %8, %10, %cst_11 {dimension_numbers = #tpu.dot_dimension_numbers<[1], [0], [0], [1], [0, 0, 1, 1], [], []>} : vector<8x4xf32>, vector<4x288xf32>, vector<8x288xf32> -> vector<8x288xf32>
    %12 = arith.addf %6, %11 : vector<8x288xf32>
    %c2 = arith.constant 2 : index
    %c0_12 = arith.constant 0 : index
    %c0_13 = arith.constant 0 : index
    %13 = vector.load %arg2[%c2, %c0_12, %c0_13] : memref<9x8x4xf32, #tpu.memory_space<vmem>>, vector<1x8x4xf32>
    %14 = vector.shape_cast %13 : vector<1x8x4xf32> to vector<8x4xf32>
    %c0_14 = arith.constant 0 : index
    %c0_15 = arith.constant 0 : index
    %c2_16 = arith.constant 2 : index
    %15 = vector.load %arg3[%c0_14, %c0_15, %c2_16] : memref<1x4x384xf32, #tpu.memory_space<vmem>>, vector<1x4x288xf32>
    %16 = vector.shape_cast %15 : vector<1x4x288xf32> to vector<4x288xf32>
    %cst_17 = arith.constant dense<0.000000e+00> : vector<8x288xf32>
    %17 = tpu.matmul %14, %16, %cst_17 {dimension_numbers = #tpu.dot_dimension_numbers<[1], [0], [0], [1], [0, 0, 1, 1], [], []>} : vector<8x4xf32>, vector<4x288xf32>, vector<8x288xf32> -> vector<8x288xf32>
    %18 = arith.addf %12, %17 : vector<8x288xf32>
    %c3 = arith.constant 3 : index
    %c0_18 = arith.constant 0 : index
    %c0_19 = arith.constant 0 : index
    %19 = vector.load %arg2[%c3, %c0_18, %c0_19] : memref<9x8x4xf32, #tpu.memory_space<vmem>>, vector<1x8x4xf32>
    %20 = vector.shape_cast %19 : vector<1x8x4xf32> to vector<8x4xf32>
    %c0_20 = arith.constant 0 : index
    %c0_21 = arith.constant 0 : index
    %c18 = arith.constant 18 : index
    %21 = vector.load %arg3[%c0_20, %c0_21, %c18] : memref<1x4x384xf32, #tpu.memory_space<vmem>>, vector<1x4x288xf32>
    %22 = vector.shape_cast %21 : vector<1x4x288xf32> to vector<4x288xf32>
    %cst_22 = arith.constant dense<0.000000e+00> : vector<8x288xf32>
    %23 = tpu.matmul %20, %22, %cst_22 {dimension_numbers = #tpu.dot_dimension_numbers<[1], [0], [0], [1], [0, 0, 1, 1], [], []>} : vector<8x4xf32>, vector<4x288xf32>, vector<8x288xf32> -> vector<8x288xf32>
    %24 = arith.addf %18, %23 : vector<8x288xf32>
    %c4 = arith.constant 4 : index
    %c0_23 = arith.constant 0 : index
    %c0_24 = arith.constant 0 : index
    %25 = vector.load %arg2[%c4, %c0_23, %c0_24] : memref<9x8x4xf32, #tpu.memory_space<vmem>>, vector<1x8x4xf32>
    %26 = vector.shape_cast %25 : vector<1x8x4xf32> to vector<8x4xf32>
    %c0_25 = arith.constant 0 : index
    %c0_26 = arith.constant 0 : index
    %c19 = arith.constant 19 : index
    %27 = vector.load %arg3[%c0_25, %c0_26, %c19] : memref<1x4x384xf32, #tpu.memory_space<vmem>>, vector<1x4x288xf32>
    %28 = vector.shape_cast %27 : vector<1x4x288xf32> to vector<4x288xf32>
    %cst_27 = arith.constant dense<0.000000e+00> : vector<8x288xf32>
    %29 = tpu.matmul %26, %28, %cst_27 {dimension_numbers = #tpu.dot_dimension_numbers<[1], [0], [0], [1], [0, 0, 1, 1], [], []>} : vector<8x4xf32>, vector<4x288xf32>, vector<8x288xf32> -> vector<8x288xf32>
    %30 = arith.addf %24, %29 : vector<8x288xf32>
    %c5 = arith.constant 5 : index
    %c0_28 = arith.constant 0 : index
    %c0_29 = arith.constant 0 : index
    %31 = vector.load %arg2[%c5, %c0_28, %c0_29] : memref<9x8x4xf32, #tpu.memory_space<vmem>>, vector<1x8x4xf32>
    %32 = vector.shape_cast %31 : vector<1x8x4xf32> to vector<8x4xf32>
    %c0_30 = arith.constant 0 : index
    %c0_31 = arith.constant 0 : index
    %c20 = arith.constant 20 : index
    %33 = vector.load %arg3[%c0_30, %c0_31, %c20] : memref<1x4x384xf32, #tpu.memory_space<vmem>>, vector<1x4x288xf32>
    %34 = vector.shape_cast %33 : vector<1x4x288xf32> to vector<4x288xf32>
    %cst_32 = arith.constant dense<0.000000e+00> : vector<8x288xf32>
    %35 = tpu.matmul %32, %34, %cst_32 {dimension_numbers = #tpu.dot_dimension_numbers<[1], [0], [0], [1], [0, 0, 1, 1], [], []>} : vector<8x4xf32>, vector<4x288xf32>, vector<8x288xf32> -> vector<8x288xf32>
    %36 = arith.addf %30, %35 : vector<8x288xf32>
    %c6 = arith.constant 6 : index
    %c0_33 = arith.constant 0 : index
    %c0_34 = arith.constant 0 : index
    %37 = vector.load %arg2[%c6, %c0_33, %c0_34] : memref<9x8x4xf32, #tpu.memory_space<vmem>>, vector<1x8x4xf32>
    %38 = vector.shape_cast %37 : vector<1x8x4xf32> to vector<8x4xf32>
    %c0_35 = arith.constant 0 : index
    %c0_36 = arith.constant 0 : index
    %c36 = arith.constant 36 : index
    %39 = vector.load %arg3[%c0_35, %c0_36, %c36] : memref<1x4x384xf32, #tpu.memory_space<vmem>>, vector<1x4x288xf32>
    %40 = vector.shape_cast %39 : vector<1x4x288xf32> to vector<4x288xf32>
    %cst_37 = arith.constant dense<0.000000e+00> : vector<8x288xf32>
    %41 = tpu.matmul %38, %40, %cst_37 {dimension_numbers = #tpu.dot_dimension_numbers<[1], [0], [0], [1], [0, 0, 1, 1], [], []>} : vector<8x4xf32>, vector<4x288xf32>, vector<8x288xf32> -> vector<8x288xf32>
    %42 = arith.addf %36, %41 : vector<8x288xf32>
    %c7 = arith.constant 7 : index
    %c0_38 = arith.constant 0 : index
    %c0_39 = arith.constant 0 : index
    %43 = vector.load %arg2[%c7, %c0_38, %c0_39] : memref<9x8x4xf32, #tpu.memory_space<vmem>>, vector<1x8x4xf32>
    %44 = vector.shape_cast %43 : vector<1x8x4xf32> to vector<8x4xf32>
    %c0_40 = arith.constant 0 : index
    %c0_41 = arith.constant 0 : index
    %c37 = arith.constant 37 : index
    %45 = vector.load %arg3[%c0_40, %c0_41, %c37] : memref<1x4x384xf32, #tpu.memory_space<vmem>>, vector<1x4x288xf32>
    %46 = vector.shape_cast %45 : vector<1x4x288xf32> to vector<4x288xf32>
    %cst_42 = arith.constant dense<0.000000e+00> : vector<8x288xf32>
    %47 = tpu.matmul %44, %46, %cst_42 {dimension_numbers = #tpu.dot_dimension_numbers<[1], [0], [0], [1], [0, 0, 1, 1], [], []>} : vector<8x4xf32>, vector<4x288xf32>, vector<8x288xf32> -> vector<8x288xf32>
    %48 = arith.addf %42, %47 : vector<8x288xf32>
    %c8 = arith.constant 8 : index
    %c0_43 = arith.constant 0 : index
    %c0_44 = arith.constant 0 : index
    %49 = vector.load %arg2[%c8, %c0_43, %c0_44] : memref<9x8x4xf32, #tpu.memory_space<vmem>>, vector<1x8x4xf32>
    %50 = vector.shape_cast %49 : vector<1x8x4xf32> to vector<8x4xf32>
    %c0_45 = arith.constant 0 : index
    %c0_46 = arith.constant 0 : index
    %c38 = arith.constant 38 : index
    %51 = vector.load %arg3[%c0_45, %c0_46, %c38] : memref<1x4x384xf32, #tpu.memory_space<vmem>>, vector<1x4x288xf32>
    %52 = vector.shape_cast %51 : vector<1x4x288xf32> to vector<4x288xf32>
    %cst_47 = arith.constant dense<0.000000e+00> : vector<8x288xf32>
    %53 = tpu.matmul %50, %52, %cst_47 {dimension_numbers = #tpu.dot_dimension_numbers<[1], [0], [0], [1], [0, 0, 1, 1], [], []>} : vector<8x4xf32>, vector<4x288xf32>, vector<8x288xf32> -> vector<8x288xf32>
    %54 = arith.addf %48, %53 : vector<8x288xf32>
    %c0_48 = arith.constant 0 : index
    %c0_49 = arith.constant 0 : index
    %c0_50 = arith.constant 0 : index
    %55 = vector.load %arg5[%c0_48, %c0_49, %c0_50] : memref<1x8x288xf32, #tpu.memory_space<vmem>>, vector<1x8x288xf32>
    %56 = vector.shape_cast %55 : vector<1x8x288xf32> to vector<8x288xf32>
    %57 = vector.shape_cast %54 : vector<8x288xf32> to vector<1x8x288xf32>
    tpu.vector_store %arg5[%c0_48, %c0_49, %c0_50], %57 {strides = array<i32>} : memref<1x8x288xf32, #tpu.memory_space<vmem>>, vector<1x8x288xf32>,
    %c0_51 = arith.constant 0 : index
    %c0_52 = arith.constant 0 : index
    %58 = vector.load %arg4[%c0_51, %c0_52] : memref<1x288xf32, #tpu.memory_space<vmem>>, vector<1x288xf32>
    %59 = vector.broadcast %58 : vector<1x288xf32> to vector<8x288xf32>
    %60 = arith.mulf %54, %59 : vector<8x288xf32>
    %cst_53 = arith.constant dense<0.000000e+00> : vector<8xf32>
    %61 = vector.multi_reduction <add>, %60, %cst_53 [1] : vector<8x288xf32> to vector<8xf32>
    %62 = vector.shape_cast %61 : vector<8xf32> to vector<8x1xf32>
    %c0_54 = arith.constant 0 : index
    %c0_55 = arith.constant 0 : index
    %c0_56 = arith.constant 0 : index
    %c0_57 = arith.constant 0 : index
    %63 = vector.load %arg6[%c0_54, %c0_55, %c0_56, %c0_57] : memref<1x2x8x1xf32, #tpu.memory_space<vmem>>, vector<1x1x8x1xf32>
    %64 = vector.shape_cast %63 : vector<1x1x8x1xf32> to vector<8x1xf32>
    %65 = vector.shape_cast %62 : vector<8x1xf32> to vector<1x1x8x1xf32>
    tpu.vector_store %arg6[%c0_54, %c0_55, %c0_56, %c0_57], %65 {strides = array<i32>} : memref<1x2x8x1xf32, #tpu.memory_space<vmem>>, vector<1x1x8x1xf32>,
    %66 = arith.mulf %60, %60 : vector<8x288xf32>
    %cst_58 = arith.constant dense<0.000000e+00> : vector<8xf32>
    %67 = vector.multi_reduction <add>, %66, %cst_58 [1] : vector<8x288xf32> to vector<8xf32>
    %68 = vector.shape_cast %67 : vector<8xf32> to vector<8x1xf32>
    %c0_59 = arith.constant 0 : index
    %c1_60 = arith.constant 1 : index
    %c0_61 = arith.constant 0 : index
    %c0_62 = arith.constant 0 : index
    %69 = vector.load %arg6[%c0_59, %c1_60, %c0_61, %c0_62] : memref<1x2x8x1xf32, #tpu.memory_space<vmem>>, vector<1x1x8x1xf32>
    %70 = vector.shape_cast %69 : vector<1x1x8x1xf32> to vector<8x1xf32>
    %71 = vector.shape_cast %68 : vector<8x1xf32> to vector<1x1x8x1xf32>
    tpu.vector_store %arg6[%c0_59, %c1_60, %c0_61, %c0_62], %71 {strides = array<i32>} : memref<1x2x8x1xf32, #tpu.memory_space<vmem>>, vector<1x1x8x1xf32>,
    return
  }
  func.func @transform_0(%arg0: i32, %arg1: i32) -> (i32, i32, i32) {
    %c0_i32 = arith.constant 0 : i32
    %c0_i32_0 = arith.constant 0 : i32
    %c0_i32_1 = arith.constant 0 : i32
    return %c0_i32, %arg1, %c0_i32_0 : i32, i32, i32
  }
  func.func @transform_1(%arg0: i32, %arg1: i32) -> (i32, i32, i32) {
    %c0_i32 = arith.constant 0 : i32
    %c0_i32_0 = arith.constant 0 : i32
    %c0_i32_1 = arith.constant 0 : i32
    return %arg0, %c0_i32, %c0_i32_0 : i32, i32, i32
  }
  func.func @transform_2(%arg0: i32, %arg1: i32) -> (i32, i32) {
    %c0_i32 = arith.constant 0 : i32
    %c0_i32_0 = arith.constant 0 : i32
    %c0_i32_1 = arith.constant 0 : i32
    return %c0_i32, %c0_i32_0 : i32, i32
  }
  func.func @transform_3(%arg0: i32, %arg1: i32) -> (i32, i32, i32) {
    %c0_i32 = arith.constant 0 : i32
    %c0_i32_0 = arith.constant 0 : i32
    return %arg0, %arg1, %c0_i32 : i32, i32, i32
  }
  func.func @transform_4(%arg0: i32, %arg1: i32) -> (i32, i32, i32, i32) {
    %c0_i32 = arith.constant 0 : i32
    %c0_i32_0 = arith.constant 0 : i32
    %c0_i32_1 = arith.constant 0 : i32
    return %arg0, %c0_i32, %arg1, %c0_i32_0 : i32, i32, i32, i32
  }
}

module attributes {stable_mosaic.version = 11 : i64} {
  func.func @_bn_act_kernel(%arg0: i32, %arg1: memref<8x1x1xf32, #tpu.memory_space<vmem>>, %arg2: memref<8x1x1xf32, #tpu.memory_space<vmem>>, %arg3: memref<1x8x16x18xf32, #tpu.memory_space<vmem>>, %arg4: memref<1x8x16x16xf32, #tpu.memory_space<vmem>>) attributes {dimension_semantics = [#tpu.dimension_semantics<parallel>], iteration_bounds = array<i64: 2>, scalar_prefetch = 0 : i64, scratch_operands = 0 : i64, tpu.core_type = #tpu.core_type<tc>, window_params = [{pipeline_mode = #tpu.pipeline_mode<synchronous>, transform_indices = @transform_0, window_bounds = array<i64: 8, 1, 1>}, {pipeline_mode = #tpu.pipeline_mode<synchronous>, transform_indices = @transform_1, window_bounds = array<i64: 8, 1, 1>}, {transform_indices = @transform_2, window_bounds = array<i64: 1, 8, 16, 18>}, {transform_indices = @transform_3, window_bounds = array<i64: 1, 8, 16, 16>}]} {
    %c0 = arith.constant 0 : index
    %c0_0 = arith.constant 0 : index
    %c0_1 = arith.constant 0 : index
    %c0_2 = arith.constant 0 : index
    %0 = vector.load %arg3[%c0, %c0_0, %c0_1, %c0_2] : memref<1x8x16x18xf32, #tpu.memory_space<vmem>>, vector<1x8x16x18xf32>
    %1 = vector.shape_cast %0 : vector<1x8x16x18xf32> to vector<8x16x18xf32>
    %c0_3 = arith.constant 0 : index
    %c0_4 = arith.constant 0 : index
    %c0_5 = arith.constant 0 : index
    %2 = vector.load %arg1[%c0_3, %c0_4, %c0_5] : memref<8x1x1xf32, #tpu.memory_space<vmem>>, vector<8x1x1xf32>
    %3 = vector.broadcast %2 : vector<8x1x1xf32> to vector<8x16x18xf32>
    %4 = arith.mulf %1, %3 : vector<8x16x18xf32>
    %c0_6 = arith.constant 0 : index
    %c0_7 = arith.constant 0 : index
    %c0_8 = arith.constant 0 : index
    %5 = vector.load %arg2[%c0_6, %c0_7, %c0_8] : memref<8x1x1xf32, #tpu.memory_space<vmem>>, vector<8x1x1xf32>
    %6 = vector.broadcast %5 : vector<8x1x1xf32> to vector<8x16x18xf32>
    %7 = arith.addf %4, %6 : vector<8x16x18xf32>
    %cst = arith.constant 2.000000e-01 : f32
    %8 = vector.broadcast %cst : f32 to vector<8x16x18xf32>
    %9 = arith.mulf %8, %7 : vector<8x16x18xf32>
    %10 = arith.maximumf %7, %9 : vector<8x16x18xf32>
    %11 = vector.extract_strided_slice %10 {offsets = [0, 0, 0], sizes = [8, 16, 16], strides = [1, 1, 1]} : vector<8x16x18xf32> to vector<8x16x16xf32>
    %c0_9 = arith.constant 0 : index
    %c0_10 = arith.constant 0 : index
    %c0_11 = arith.constant 0 : index
    %c0_12 = arith.constant 0 : index
    %12 = vector.load %arg4[%c0_9, %c0_10, %c0_11, %c0_12] : memref<1x8x16x16xf32, #tpu.memory_space<vmem>>, vector<1x8x16x16xf32>
    %13 = vector.shape_cast %12 : vector<1x8x16x16xf32> to vector<8x16x16xf32>
    %14 = vector.shape_cast %11 : vector<8x16x16xf32> to vector<1x8x16x16xf32>
    tpu.vector_store %arg4[%c0_9, %c0_10, %c0_11, %c0_12], %14 {strides = array<i32>} : memref<1x8x16x16xf32, #tpu.memory_space<vmem>>, vector<1x8x16x16xf32>,
    return
  }
  func.func @transform_0(%arg0: i32) -> (i32, i32, i32) {
    %c0_i32 = arith.constant 0 : i32
    %c0_i32_0 = arith.constant 0 : i32
    %c0_i32_1 = arith.constant 0 : i32
    %c0_i32_2 = arith.constant 0 : i32
    return %c0_i32, %c0_i32_0, %c0_i32_1 : i32, i32, i32
  }
  func.func @transform_1(%arg0: i32) -> (i32, i32, i32) {
    %c0_i32 = arith.constant 0 : i32
    %c0_i32_0 = arith.constant 0 : i32
    %c0_i32_1 = arith.constant 0 : i32
    %c0_i32_2 = arith.constant 0 : i32
    return %c0_i32, %c0_i32_0, %c0_i32_1 : i32, i32, i32
  }
  func.func @transform_2(%arg0: i32) -> (i32, i32, i32, i32) {
    %c0_i32 = arith.constant 0 : i32
    %c0_i32_0 = arith.constant 0 : i32
    %c0_i32_1 = arith.constant 0 : i32
    %c0_i32_2 = arith.constant 0 : i32
    return %arg0, %c0_i32, %c0_i32_0, %c0_i32_1 : i32, i32, i32, i32
  }
  func.func @transform_3(%arg0: i32) -> (i32, i32, i32, i32) {
    %c0_i32 = arith.constant 0 : i32
    %c0_i32_0 = arith.constant 0 : i32
    %c0_i32_1 = arith.constant 0 : i32
    %c0_i32_2 = arith.constant 0 : i32
    return %arg0, %c0_i32, %c0_i32_0, %c0_i32_1 : i32, i32, i32, i32
  }
}

</mosaic_0001>

<llo_original>
// kernel: conv_block.3
$region0: #{conv_block.3}
  #allocation0 [shape = 'u32[]', space=smem, size = 0x4, offset = 0x4, fixed_abs, tag = 'smem constant byte address 0x4 - core index']
  #allocation1 [shape = 'u32[72,128]{1,0:T(1,128)}', space=vmem, size = 0x9000, scoped, tag = 'internal scratch']
  %s0 = inlined_call_operand.vmem [shape: f32[8,1,1], index: 0, kind: input, shape index: {}]
  %s1 = inlined_call_operand.vmem [shape: f32[8,1,1], index: 1, kind: input, shape index: {}]
  %s2 = inlined_call_operand.vmem [shape: f32[2,8,16,18], index: 2, kind: input, shape index: {}]
  %s3 = inlined_call_operand.hbm [shape: f32[2,8,16,16], index: 3, kind: output, shape index: {}]
  %s4 = sld [smem:[#allocation0]]
  $region45: #{conv_block.3} parent=0
    _
  %s6 = ssub.s32 1, %s4
  %s7 = scalar_select 0, %s6, %s4
  $region1: #{conv_block.3} parent=0
    #allocation2 [shape = 'u8[131072]{0}', space=vmem, size = 0x20000, scoped, tag = 'output window, operand 0']
    #allocation3 [shape = 's32[2]{0}', space=sflag, size = 0x8, scoped, tag = 'scoped memory for conv_block.3']
    %8 = vsyncpa [#allocation3], 0
    %s9 = scalar_lea.sflag [#allocation3], 1
    %10 = vsyncpa %s9, 0
    loop: start=0, step=1, limit=4
    $region2: #{conv_block.3} parent=1 // loop_pre_header
      _
    $region3: #{conv_block.3} parent=1 // loop_header
      %s12 = sphi 0, %s16
      %p13 = scmp.ge.s32.totalorder %s12, 4
      %s20 = sphi 0, %s20
      %s22 = sphi 0, %s20
      %s23 = sphi 0, %s22
      %s37 = sphi 0, %s23
      %s41 = sphi 0, %s41
      %s43 = sphi 0, %s41
      %s44 = sphi 0, %s43
      %s58 = sphi 0, %s44
      %s64 = sphi 0, %s66
      %s67 = sphi 0, %s64
      %s68 = sphi 0, %s67
      %s84 = sphi 0, %s68
      %s90 = sphi 0, %s92
      %s93 = sphi 0, %s90
      %s94 = sphi 0, %s93
      %s110 = sphi 0, %s94
    $region4: #{conv_block.3} parent=1 // loop_header_branch
      %15 = sbr.rel (%p13) target = $region8
    $region5: #{conv_block.3} parent=1 // loop_body
      %s17 = ssub.s32 %s12, 1
      %s18 = ssub.s32 %s12, 2
      %s19 = sadd.s32 %s12, 1
      %s21 = sadd.s32 %s20, 1
      %p24 = scmp.eq.s32.totalorder %s12, 1
      %p25 = scmp.ne.s32.totalorder %s20, %s22
      %p26 = scmp.eq.s32.totalorder %s12, 0
      %p27 = por %p25, %p26
      %p28 = scmp.ne.s32.totalorder %s20, %s22
      %p29 = scmp.eq.s32.totalorder %s17, 1
      %p30 = por %p28, %p29
      %p31 = scmp.ne.s32.totalorder %s22, %s23
      %p32 = scmp.eq.s32.totalorder %s17, 0
      %p33 = por %p31, %p32
      %p34 = scmp.ne.s32.totalorder %s22, %s23
      %p35 = scmp.eq.s32.totalorder %s18, 1
      %p36 = por %p34, %p35
      %p38 = scmp.ne.s32.totalorder %s23, %s37
      %p39 = scmp.eq.s32.totalorder %s18, 0
      %p40 = por %p38, %p39
      %s42 = sadd.s32 %s41, 1
      %p45 = scmp.eq.s32.totalorder %s12, 1
      %p46 = scmp.ne.s32.totalorder %s41, %s43
      %p47 = scmp.eq.s32.totalorder %s12, 0
      %p48 = por %p46, %p47
      %p49 = scmp.ne.s32.totalorder %s41, %s43
      %p50 = scmp.eq.s32.totalorder %s17, 1
      %p51 = por %p49, %p50
      %p52 = scmp.ne.s32.totalorder %s43, %s44
      %p53 = scmp.eq.s32.totalorder %s17, 0
      %p54 = por %p52, %p53
      %p55 = scmp.ne.s32.totalorder %s43, %s44
      %p56 = scmp.eq.s32.totalorder %s18, 1
      %p57 = por %p55, %p56
      %p59 = scmp.ne.s32.totalorder %s44, %s58
      %p60 = scmp.eq.s32.totalorder %s18, 0
      %p61 = por %p59, %p60
      %s62 = ssub.s32 %s12, %s19
      %p63 = scmp.eq.s32.totalorder %s62, 0
      %s65 = sadd.s32 %s64, 1
      %s66 = scalar_select %p63, %s64, %s65
      %p69 = pneg %p63
      %p70 = scmp.eq.s32.totalorder %s12, 1
      %p71 = por %p69, %p70
      %p72 = scmp.ne.s32.totalorder %s64, %s67
      %p73 = scmp.eq.s32.totalorder %s12, 0
      %p74 = por %p72, %p73
      %p75 = scmp.ne.s32.totalorder %s64, %s67
      %p76 = scmp.eq.s32.totalorder %s17, 1
      %p77 = por %p75, %p76
      %p78 = scmp.ne.s32.totalorder %s67, %s68
      %p79 = scmp.eq.s32.totalorder %s17, 0
      %p80 = por %p78, %p79
      %p81 = scmp.ne.s32.totalorder %s67, %s68
      %p82 = scmp.eq.s32.totalorder %s18, 1
      %p83 = por %p81, %p82
      %p85 = scmp.ne.s32.totalorder %s68, %s84
      %p86 = scmp.eq.s32.totalorder %s18, 0
      %p87 = por %p85, %p86
      %s88 = ssub.s32 %s12, %s19
      %p89 = scmp.eq.s32.totalorder %s88, 0
      %s91 = sadd.s32 %s90, 1
      %s92 = scalar_select %p89, %s90, %s91
      %p95 = pneg %p89
      %p96 = scmp.eq.s32.totalorder %s12, 1
      %p97 = por %p95, %p96
      %p98 = scmp.ne.s32.totalorder %s90, %s93
      %p99 = scmp.eq.s32.totalorder %s12, 0
      %p100 = por %p98, %p99
      %p101 = scmp.ne.s32.totalorder %s90, %s93
      %p102 = scmp.eq.s32.totalorder %s17, 1
      %p103 = por %p101, %p102
      %p104 = scmp.ne.s32.totalorder %s93, %s94
      %p105 = scmp.eq.s32.totalorder %s17, 0
      %p106 = por %p104, %p105
      %p107 = scmp.ne.s32.totalorder %s93, %s94
      %p108 = scmp.eq.s32.totalorder %s18, 1
      %p109 = por %p107, %p108
      %p111 = scmp.ne.s32.totalorder %s94, %s110
      %p112 = scmp.eq.s32.totalorder %s18, 0
      %p113 = por %p111, %p112
      %p114 = scmp.le.s32.totalorder 1, %s12
      %p115 = scmp.lt.s32.totalorder %s12, 3
      %p116 = pnand %p114, %p115
      %p117 = pneg %p116
      // Predicated region
      $region9: #{conv_block.3} parent=5 // pred_check
        _
      $region10: #{conv_block.3} parent=5 // pred_check_branch
        %119 = sbr.rel (%p116) target = $region12
      $region11: #{conv_block.3} parent=5 // pred_region
        %s120 = ssub.s32 %s12, 1
        // Predicated region
        $region13: #{conv_block.3} parent=11 // pred_check
          %p121 = pneg %p33
        $region14: #{conv_block.3} parent=11 // pred_check_branch
          %123 = sbr.rel (%p121) target = $region16
        $region15: #{conv_block.3} parent=11 // pred_region
          _
        $region16: #{conv_block.3} parent=11 // pred_fallthru
          _
        // Predicated region
        $region17: #{conv_block.3} parent=11 // pred_check
          %p124 = pneg %p54
        $region18: #{conv_block.3} parent=11 // pred_check_branch
          %126 = sbr.rel (%p124) target = $region20
        $region19: #{conv_block.3} parent=11 // pred_region
          _
        $region20: #{conv_block.3} parent=11 // pred_fallthru
          _
      $region12: #{conv_block.3} parent=5 // pred_fallthru
        _
      %p127 = scmp.lt.s32.totalorder %s12, 2
      // Predicated region
      $region21: #{conv_block.3} parent=5 // pred_check
        %p128 = pneg %p127
      $region22: #{conv_block.3} parent=5 // pred_check_branch
        %130 = sbr.rel (%p128) target = $region24
      $region23: #{conv_block.3} parent=5 // pred_region
        // Predicated region
        $region25: #{conv_block.3} parent=23 // pred_check
          %p131 = pneg %p74
        $region26: #{conv_block.3} parent=23 // pred_check_branch
          %133 = sbr.rel (%p131) target = $region28
        $region27: #{conv_block.3} parent=23 // pred_region
          %p134 = scmp.lt.s32.totalorder %s12, 1
          %s135 = scalar_select %p134, %s12, 1
          %s136 = smul.addr %s135, 16
          %s137 = smul.addr %s136, 8
          %s138 = scalar_lea.vmem %s2, %s137
        $region28: #{conv_block.3} parent=23 // pred_fallthru
          _
      $region24: #{conv_block.3} parent=5 // pred_fallthru
        _
      %p139 = scmp.le.s32.totalorder 1, %s12
      %p140 = scmp.lt.s32.totalorder %s12, 3
      %p141 = pnand %p139, %p140
      %p142 = pneg %p141
      // Predicated region
      $region29: #{conv_block.3} parent=5 // pred_check
        _
      $region30: #{conv_block.3} parent=5 // pred_check_branch
        %144 = sbr.rel (%p141) target = $region32
      $region31: #{conv_block.3} parent=5 // pred_region
        %s145 = ssub.s32 %s12, 1
        %p146 = pneg %p33
        %p147 = pneg %p30
        %p148 = pneg %p54
        %p149 = pneg %p51
        %p150 = scmp.lt.s32.totalorder %s17, 1
        %s151 = scalar_select %p150, %s17, 1
        %s152 = smul.addr %s151, 16
        %s153 = smul.addr %s152, 8
        %s154 = scalar_lea.vmem %s2, %s153
        %p155 = pneg %p80
        %p156 = pneg %p77
        %p157 = pneg %p106
        %p158 = pneg %p103
        %s159 = sand.u32 %s93, 1
        %s160 = scalar_lea.sflag [#allocation3], %s159
        %s161 = sand.u32 %s93, 1
        %s162 = smul.addr %s161, 128
        %s163 = scalar_lea.vmem [#allocation2], %s162
        %p164 = scmp.lt.s32.totalorder %s17, 1
        %s165 = scalar_select %p164, %s17, 1
        %s166 = smul.addr %s165, 16
        %s167 = smul.addr %s166, 8
        %s168 = scalar_lea.vmem %s2, %s167
        %v169 = vld [vmem:[%s168] sm:$0xff]
        %v170 = vld [vmem:[%s168 + $0x8] sm:$0xff]
        %v171 = vld [vmem:[%s168 + $0x10] sm:$0xff]
        %v172 = vld [vmem:[%s168 + $0x18] sm:$0xff]
        %v173 = vld [vmem:[%s168 + $0x20] sm:$0xff]
        %v174 = vld [vmem:[%s168 + $0x28] sm:$0xff]
        %v175 = vld [vmem:[%s168 + $0x30] sm:$0xff]
        %v176 = vld [vmem:[%s168 + $0x38] sm:$0xff]
        %v177 = vld [vmem:[%s168 + $0x40] sm:$0xff]
        %v178 = vld [vmem:[%s168 + $0x48] sm:$0xff]
        %v179 = vld [vmem:[%s168 + $0x50] sm:$0xff]
        %v180 = vld [vmem:[%s168 + $0x58] sm:$0xff]
        %v181 = vld [vmem:[%s168 + $0x60] sm:$0xff]
        %v182 = vld [vmem:[%s168 + $0x68] sm:$0xff]
        %v183 = vld [vmem:[%s168 + $0x70] sm:$0xff]
        %v184 = vld [vmem:[%s168 + $0x78] sm:$0xff]
        %v185 = vld [vmem:[%s0] sm:$0x1]
        %v186 = vld [vmem:[%s0 + $0x1] sm:$0x1]
        %v187 = vld [vmem:[%s0 + $0x2] sm:$0x1]
        %v188 = vld [vmem:[%s0 + $0x3] sm:$0x1]
        %v189 = vld [vmem:[%s0 + $0x4] sm:$0x1]
        %v190 = vld [vmem:[%s0 + $0x5] sm:$0x1]
        %v191 = vld [vmem:[%s0 + $0x6] sm:$0x1]
        %v192 = vld [vmem:[%s0 + $0x7] sm:$0x1]
        %v201 = vperm.slane %v185, 0
        %v202 = vperm.slane %v186, 0
        %v203 = vperm.slane %v187, 0
        %v204 = vperm.slane %v188, 0
        %v205 = vperm.slane %v189, 0
        %v206 = vperm.slane %v190, 0
        %v207 = vperm.slane %v191, 0
        %v208 = vperm.slane %v192, 0
        %209 = vset.pattern.permute.xlu0 0
        %210 = vperm.xlu0 %209, %v201
        %v211 = vpop.permute.xlu0 %210
        %213 = vset.pattern.permute.xlu0 0
        %214 = vperm.xlu0 %213, %v202
        %v215 = vpop.permute.xlu0 %214
        %217 = vset.pattern.permute.xlu0 0
        %218 = vperm.xlu0 %217, %v203
        %v219 = vpop.permute.xlu0 %218
        %221 = vset.pattern.permute.xlu0 0
        %222 = vperm.xlu0 %221, %v204
        %v223 = vpop.permute.xlu0 %222
        %225 = vset.pattern.permute.xlu0 0
        %226 = vperm.xlu0 %225, %v205
        %v227 = vpop.permute.xlu0 %226
        %229 = vset.pattern.permute.xlu0 0
        %230 = vperm.xlu0 %229, %v206
        %v231 = vpop.permute.xlu0 %230
        %233 = vset.pattern.permute.xlu0 0
        %234 = vperm.xlu0 %233, %v207
        %v235 = vpop.permute.xlu0 %234
        %237 = vset.pattern.permute.xlu0 0
        %238 = vperm.xlu0 %237, %v208
        %v239 = vpop.permute.xlu0 %238
        %v241 = vmul.f32 %v169, %v211
        %v242 = vmul.f32 %v170, %v211
        %v243 = vmul.f32 %v171, %v215
        %v244 = vmul.f32 %v172, %v215
        %v245 = vmul.f32 %v173, %v219
        %v246 = vmul.f32 %v174, %v219
        %v247 = vmul.f32 %v175, %v223
        %v248 = vmul.f32 %v176, %v223
        %v249 = vmul.f32 %v177, %v227
        %v250 = vmul.f32 %v178, %v227
        %v251 = vmul.f32 %v179, %v231
        %v252 = vmul.f32 %v180, %v231
        %v253 = vmul.f32 %v181, %v235
        %v254 = vmul.f32 %v182, %v235
        %v255 = vmul.f32 %v183, %v239
        %v256 = vmul.f32 %v184, %v239
        %v257 = vld [vmem:[%s1] sm:$0x1]
        %v258 = vld [vmem:[%s1 + $0x1] sm:$0x1]
        %v259 = vld [vmem:[%s1 + $0x2] sm:$0x1]
        %v260 = vld [vmem:[%s1 + $0x3] sm:$0x1]
        %v261 = vld [vmem:[%s1 + $0x4] sm:$0x1]
        %v262 = vld [vmem:[%s1 + $0x5] sm:$0x1]
        %v263 = vld [vmem:[%s1 + $0x6] sm:$0x1]
        %v264 = vld [vmem:[%s1 + $0x7] sm:$0x1]
        %v273 = vperm.slane %v257, 0
        %v274 = vperm.slane %v258, 0
        %v275 = vperm.slane %v259, 0
        %v276 = vperm.slane %v260, 0
        %v277 = vperm.slane %v261, 0
        %v278 = vperm.slane %v262, 0
        %v279 = vperm.slane %v263, 0
        %v280 = vperm.slane %v264, 0
        %281 = vset.pattern.permute.xlu0 0
        %282 = vperm.xlu0 %281, %v273
        %v283 = vpop.permute.xlu0 %282
        %285 = vset.pattern.permute.xlu0 0
        %286 = vperm.xlu0 %285, %v274
        %v287 = vpop.permute.xlu0 %286
        %289 = vset.pattern.permute.xlu0 0
        %290 = vperm.xlu0 %289, %v275
        %v291 = vpop.permute.xlu0 %290
        %293 = vset.pattern.permute.xlu0 0
        %294 = vperm.xlu0 %293, %v276
        %v295 = vpop.permute.xlu0 %294
        %297 = vset.pattern.permute.xlu0 0
        %298 = vperm.xlu0 %297, %v277
        %v299 = vpop.permute.xlu0 %298
        %301 = vset.pattern.permute.xlu0 0
        %302 = vperm.xlu0 %301, %v278
        %v303 = vpop.permute.xlu0 %302
        %305 = vset.pattern.permute.xlu0 0
        %306 = vperm.xlu0 %305, %v279
        %v307 = vpop.permute.xlu0 %306
        %309 = vset.pattern.permute.xlu0 0
        %310 = vperm.xlu0 %309, %v280
        %v311 = vpop.permute.xlu0 %310
        %v313 = vadd.f32 %v241, %v283
        %v314 = vadd.f32 %v242, %v283
        %v315 = vadd.f32 %v243, %v287
        %v316 = vadd.f32 %v244, %v287
        %v317 = vadd.f32 %v245, %v291
        %v318 = vadd.f32 %v246, %v291
        %v319 = vadd.f32 %v247, %v295
        %v320 = vadd.f32 %v248, %v295
        %v321 = vadd.f32 %v249, %v299
        %v322 = vadd.f32 %v250, %v299
        %v323 = vadd.f32 %v251, %v303
        %v324 = vadd.f32 %v252, %v303
        %v325 = vadd.f32 %v253, %v307
        %v326 = vadd.f32 %v254, %v307
        %v327 = vadd.f32 %v255, %v311
        %v328 = vadd.f32 %v256, %v311
        %v329 = vmul.f32 %v313, 0.2
        %v330 = vmul.f32 %v314, 0.2
        %v331 = vmul.f32 %v315, 0.2
        %v332 = vmul.f32 %v316, 0.2
        %v333 = vmul.f32 %v317, 0.2
        %v334 = vmul.f32 %v318, 0.2
        %v335 = vmul.f32 %v319, 0.2
        %v336 = vmul.f32 %v320, 0.2
        %v337 = vmul.f32 %v321, 0.2
        %v338 = vmul.f32 %v322, 0.2
        %v339 = vmul.f32 %v323, 0.2
        %v340 = vmul.f32 %v324, 0.2
        %v341 = vmul.f32 %v325, 0.2
        %v342 = vmul.f32 %v326, 0.2
        %v343 = vmul.f32 %v327, 0.2
        %v344 = vmul.f32 %v328, 0.2
        %v345 = vmax.f32 %v313, %v329
        %v346 = vmax.f32 %v314, %v330
        %v347 = vmax.f32 %v315, %v331
        %v348 = vmax.f32 %v316, %v332
        %v349 = vmax.f32 %v317, %v333
        %v350 = vmax.f32 %v318, %v334
        %v351 = vmax.f32 %v319, %v335
        %v352 = vmax.f32 %v320, %v336
        %v353 = vmax.f32 %v321, %v337
        %v354 = vmax.f32 %v322, %v338
        %v355 = vmax.f32 %v323, %v339
        %v356 = vmax.f32 %v324, %v340
        %v357 = vmax.f32 %v325, %v341
        %v358 = vmax.f32 %v326, %v342
        %v359 = vmax.f32 %v327, %v343
        %v360 = vmax.f32 %v328, %v344
        %vm361 = vcmask 130048
        %362 = vst.msk [vmem:[%s163] sm:$0xff] %vm361, %v345
        %363 = vst.msk [vmem:[%s163 + $0x8] sm:$0xff] %vm361, %v346
        %364 = vst.msk [vmem:[%s163 + $0x10] sm:$0xff] %vm361, %v347
        %365 = vst.msk [vmem:[%s163 + $0x18] sm:$0xff] %vm361, %v348
        %366 = vst.msk [vmem:[%s163 + $0x20] sm:$0xff] %vm361, %v349
        %367 = vst.msk [vmem:[%s163 + $0x28] sm:$0xff] %vm361, %v350
        %368 = vst.msk [vmem:[%s163 + $0x30] sm:$0xff] %vm361, %v351
        %369 = vst.msk [vmem:[%s163 + $0x38] sm:$0xff] %vm361, %v352
        %370 = vst.msk [vmem:[%s163 + $0x40] sm:$0xff] %vm361, %v353
        %371 = vst.msk [vmem:[%s163 + $0x48] sm:$0xff] %vm361, %v354
        %372 = vst.msk [vmem:[%s163 + $0x50] sm:$0xff] %vm361, %v355
        %373 = vst.msk [vmem:[%s163 + $0x58] sm:$0xff] %vm361, %v356
        %374 = vst.msk [vmem:[%s163 + $0x60] sm:$0xff] %vm361, %v357
        %375 = vst.msk [vmem:[%s163 + $0x68] sm:$0xff] %vm361, %v358
        %376 = vst.msk [vmem:[%s163 + $0x70] sm:$0xff] %vm361, %v359
        %377 = vst.msk [vmem:[%s163 + $0x78] sm:$0xff] %vm361, %v360
        %s378 = sand.u32 %s93, 1
        %s379 = scalar_lea.sflag [#allocation3], %s378
        %s380 = sand.u32 %s93, 1
        %s381 = smul.addr %s380, 128
        %s382 = scalar_lea.vmem [#allocation2], %s381
        // Predicated region
        $region33: #{conv_block.3} parent=31 // pred_check
          %p383 = pneg %p103
        $region34: #{conv_block.3} parent=31 // pred_check_branch
          %385 = sbr.rel (%p383) target = $region36
        $region35: #{conv_block.3} parent=31 // pred_region
          %387 = vsyncadd %s379, 0
          %s388 = smul.addr %s17, 16
          %s389 = smul.addr %s388, 8
          %s390 = scalar_lea.hbm %s3, %s389
          %s391 = sshll.u32 %s382, 4
          %s392 = int_to_ptr.vmem [resolvable:$true] %s391
          %s393 = sshll.u32 %s390, 4
          %s394 = int_to_ptr.hbm [resolvable:$true] %s393
          %399 = dma.vmem_to_hbm [thread:$0]  %s392, 2048, %s394, %s379, 128, 128, 8
        $region36: #{conv_block.3} parent=31 // pred_fallthru
          _
      $region32: #{conv_block.3} parent=5 // pred_fallthru
        _
      %p400 = scmp.le.s32.totalorder 2, %s12
      // Predicated region
      $region37: #{conv_block.3} parent=5 // pred_check
        %p401 = pneg %p400
      $region38: #{conv_block.3} parent=5 // pred_check_branch
        %403 = sbr.rel (%p401) target = $region40
      $region39: #{conv_block.3} parent=5 // pred_region
        %s404 = ssub.s32 %s12, 2
        // Predicated region
        $region41: #{conv_block.3} parent=39 // pred_check
          %p405 = pneg %p109
        $region42: #{conv_block.3} parent=39 // pred_check_branch
          %407 = sbr.rel (%p405) target = $region44
        $region43: #{conv_block.3} parent=39 // pred_region
          %s408 = sand.u32 %s94, 1
          %s409 = scalar_lea.sflag [#allocation3], %s408
          %s410 = sand.u32 %s94, 1
          %s411 = smul.addr %s410, 128
          %s412 = scalar_lea.vmem [#allocation2], %s411
          %414 = dma.done %s409, 2048
        $region44: #{conv_block.3} parent=39 // pred_fallthru
          _
      $region40: #{conv_block.3} parent=5 // pred_fallthru
        _
    $region6: #{conv_block.3} parent=1 // loop_footer
      %s16 = sadd.s32 1, %s12
    $region7: #{conv_block.3} parent=1 // loop_footer_branch
      %11 = sbr.rel target = $region3
    $region8: #{conv_block.3} parent=1 // loop_exit
      _
    %415 = vsyncpa [#allocation3], 1
    %s416 = scalar_lea.sflag [#allocation3], 1
    %417 = vsyncpa %s416, 1

// kernel: conv_block.2
$region0: #{conv_block.2}
  #allocation0 [shape = 'u32[]', space=smem, size = 0x4, offset = 0x4, fixed_abs, tag = 'smem constant byte address 0x4 - core index']
  #allocation1 [shape = 'u32[72,128]{1,0:T(1,128)}', space=vmem, size = 0x9000, scoped, tag = 'internal scratch']
  %s0 = inlined_call_operand.vmem [shape: f32[9,8,4], index: 0, kind: input, shape index: {}]
  %s1 = inlined_call_operand.vmem [shape: f32[2,4,384], index: 1, kind: input, shape index: {}]
  %s2 = inlined_call_operand.vmem [shape: f32[1,288], index: 2, kind: input, shape index: {}]
  %s3 = inlined_call_operand.vmem [shape: f32[2,8,288], index: 3, kind: output, shape index: {0}]
  %s4 = inlined_call_operand.vmem [shape: f32[2,2,8,1], index: 4, kind: output, shape index: {1}]
  %5 = xla_tuple %s3, %s4
  %s6 = sld [smem:[#allocation0]]
  $region53: #{conv_block.2} parent=0
    _
  %s8 = ssub.s32 1, %s6
  %s9 = scalar_select 0, %s8, %s6
  loop: start=0, step=1, limit=4
  $region2: #{conv_block.2} parent=0 // loop_pre_header
    _
  $region3: #{conv_block.2} parent=0 // loop_header
    %s11 = sphi 0, %s15
    %p12 = scmp.ge.s32.totalorder %s11, 4
    %s18 = sphi 0, %s30
    %s19 = sphi 0, %s26
    %s20 = sphi 0, %s18
    %s21 = sphi 0, %s19
    %s22 = sphi 0, %s20
    %s23 = sphi 0, %s21
    %s33 = sphi 0, %s35
    %s36 = sphi 0, %s33
    %s37 = sphi 0, %s36
    %s53 = sphi 0, %s37
    %s59 = sphi 0, %s61
    %s62 = sphi 0, %s59
    %s63 = sphi 0, %s62
    %s79 = sphi 0, %s63
    %s83 = sphi 0, %s83
    %s85 = sphi 0, %s83
    %s86 = sphi 0, %s85
    %s100 = sphi 0, %s86
    %s108 = sphi 0, %s110
    %s111 = sphi 0, %s108
    %s112 = sphi 0, %s111
    %s128 = sphi 0, %s112
    %s136 = sphi 0, %s138
    %s139 = sphi 0, %s136
    %s140 = sphi 0, %s139
    %s156 = sphi 0, %s140
  $region4: #{conv_block.2} parent=0 // loop_header_branch
    %14 = sbr.rel (%p12) target = $region8
  $region5: #{conv_block.2} parent=0 // loop_body
    %s16 = ssub.s32 %s11, 1
    %s17 = ssub.s32 %s11, 2
    %s24 = sadd.s32 1, %s19
    %p25 = scmp.ge.s32.totalorder %s24, 1
    %s26 = scalar_select %p25, 0, %s24
    %s27 = sadd.s32 1, %s18
    %s28 = scalar_select %p25, %s27, %s18
    %p29 = scmp.ge.s32.totalorder %s28, 2
    %s30 = scalar_select %p29, 0, %s28
    %s31 = ssub.s32 %s19, %s26
    %p32 = scmp.eq.s32.totalorder %s31, 0
    %s34 = sadd.s32 %s33, 1
    %s35 = scalar_select %p32, %s33, %s34
    %p38 = pneg %p32
    %p39 = scmp.eq.s32.totalorder %s11, 1
    %p40 = por %p38, %p39
    %p41 = scmp.ne.s32.totalorder %s33, %s36
    %p42 = scmp.eq.s32.totalorder %s11, 0
    %p43 = por %p41, %p42
    %p44 = scmp.ne.s32.totalorder %s33, %s36
    %p45 = scmp.eq.s32.totalorder %s16, 1
    %p46 = por %p44, %p45
    %p47 = scmp.ne.s32.totalorder %s36, %s37
    %p48 = scmp.eq.s32.totalorder %s16, 0
    %p49 = por %p47, %p48
    %p50 = scmp.ne.s32.totalorder %s36, %s37
    %p51 = scmp.eq.s32.totalorder %s17, 1
    %p52 = por %p50, %p51
    %p54 = scmp.ne.s32.totalorder %s37, %s53
    %p55 = scmp.eq.s32.totalorder %s17, 0
    %p56 = por %p54, %p55
    %s57 = ssub.s32 %s18, %s30
    %p58 = scmp.eq.s32.totalorder %s57, 0
    %s60 = sadd.s32 %s59, 1
    %s61 = scalar_select %p58, %s59, %s60
    %p64 = pneg %p58
    %p65 = scmp.eq.s32.totalorder %s11, 1
    %p66 = por %p64, %p65
    %p67 = scmp.ne.s32.totalorder %s59, %s62
    %p68 = scmp.eq.s32.totalorder %s11, 0
    %p69 = por %p67, %p68
    %p70 = scmp.ne.s32.totalorder %s59, %s62
    %p71 = scmp.eq.s32.totalorder %s16, 1
    %p72 = por %p70, %p71
    %p73 = scmp.ne.s32.totalorder %s62, %s63
    %p74 = scmp.eq.s32.totalorder %s16, 0
    %p75 = por %p73, %p74
    %p76 = scmp.ne.s32.totalorder %s62, %s63
    %p77 = scmp.eq.s32.totalorder %s17, 1
    %p78 = por %p76, %p77
    %p80 = scmp.ne.s32.totalorder %s63, %s79
    %p81 = scmp.eq.s32.totalorder %s17, 0
    %p82 = por %p80, %p81
    %s84 = sadd.s32 %s83, 1
    %p87 = scmp.eq.s32.totalorder %s11, 1
    %p88 = scmp.ne.s32.totalorder %s83, %s85
    %p89 = scmp.eq.s32.totalorder %s11, 0
    %p90 = por %p88, %p89
    %p91 = scmp.ne.s32.totalorder %s83, %s85
    %p92 = scmp.eq.s32.totalorder %s16, 1
    %p93 = por %p91, %p92
    %p94 = scmp.ne.s32.totalorder %s85, %s86
    %p95 = scmp.eq.s32.totalorder %s16, 0
    %p96 = por %p94, %p95
    %p97 = scmp.ne.s32.totalorder %s85, %s86
    %p98 = scmp.eq.s32.totalorder %s17, 1
    %p99 = por %p97, %p98
    %p101 = scmp.ne.s32.totalorder %s86, %s100
    %p102 = scmp.eq.s32.totalorder %s17, 0
    %p103 = por %p101, %p102
    %s104 = ssub.s32 %s18, %s30
    %s105 = ssub.s32 %s19, %s26
    %s106 = sor.u32 %s104, %s105
    %p107 = scmp.eq.s32.totalorder %s106, 0
    %s109 = sadd.s32 %s108, 1
    %s110 = scalar_select %p107, %s108, %s109
    %p113 = pneg %p107
    %p114 = scmp.eq.s32.totalorder %s11, 1
    %p115 = por %p113, %p114
    %p116 = scmp.ne.s32.totalorder %s108, %s111
    %p117 = scmp.eq.s32.totalorder %s11, 0
    %p118 = por %p116, %p117
    %p119 = scmp.ne.s32.totalorder %s108, %s111
    %p120 = scmp.eq.s32.totalorder %s16, 1
    %p121 = por %p119, %p120
    %p122 = scmp.ne.s32.totalorder %s111, %s112
    %p123 = scmp.eq.s32.totalorder %s16, 0
    %p124 = por %p122, %p123
    %p125 = scmp.ne.s32.totalorder %s111, %s112
    %p126 = scmp.eq.s32.totalorder %s17, 1
    %p127 = por %p125, %p126
    %p129 = scmp.ne.s32.totalorder %s112, %s128
    %p130 = scmp.eq.s32.totalorder %s17, 0
    %p131 = por %p129, %p130
    %s132 = ssub.s32 %s18, %s30
    %s133 = ssub.s32 %s19, %s26
    %s134 = sor.u32 %s132, %s133
    %p135 = scmp.eq.s32.totalorder %s134, 0
    %s137 = sadd.s32 %s136, 1
    %s138 = scalar_select %p135, %s136, %s137
    %p141 = pneg %p135
    %p142 = scmp.eq.s32.totalorder %s11, 1
    %p143 = por %p141, %p142
    %p144 = scmp.ne.s32.totalorder %s136, %s139
    %p145 = scmp.eq.s32.totalorder %s11, 0
    %p146 = por %p144, %p145
    %p147 = scmp.ne.s32.totalorder %s136, %s139
    %p148 = scmp.eq.s32.totalorder %s16, 1
    %p149 = por %p147, %p148
    %p150 = scmp.ne.s32.totalorder %s139, %s140
    %p151 = scmp.eq.s32.totalorder %s16, 0
    %p152 = por %p150, %p151
    %p153 = scmp.ne.s32.totalorder %s139, %s140
    %p154 = scmp.eq.s32.totalorder %s17, 1
    %p155 = por %p153, %p154
    %p157 = scmp.ne.s32.totalorder %s140, %s156
    %p158 = scmp.eq.s32.totalorder %s17, 0
    %p159 = por %p157, %p158
    %p160 = scmp.le.s32.totalorder 1, %s11
    %p161 = scmp.lt.s32.totalorder %s11, 3
    %p162 = pnand %p160, %p161
    %p163 = pneg %p162
    // Predicated region
    $region9: #{conv_block.2} parent=5 // pred_check
      _
    $region10: #{conv_block.2} parent=5 // pred_check_branch
      %165 = sbr.rel (%p162) target = $region12
    $region11: #{conv_block.2} parent=5 // pred_region
      %s166 = ssub.s32 %s11, 1
      // Predicated region
      $region13: #{conv_block.2} parent=11 // pred_check
        %p167 = pneg %p49
      $region14: #{conv_block.2} parent=11 // pred_check_branch
        %169 = sbr.rel (%p167) target = $region16
      $region15: #{conv_block.2} parent=11 // pred_region
        %p170 = scmp.lt.s32.totalorder %s21, 0
        %s171 = scalar_select %p170, %s21, 0
        %s172 = smul.addr %s171, 8
        %s173 = scalar_lea.vmem %s0, %s172
      $region16: #{conv_block.2} parent=11 // pred_fallthru
        _
      // Predicated region
      $region17: #{conv_block.2} parent=11 // pred_check
        %p174 = pneg %p96
      $region18: #{conv_block.2} parent=11 // pred_check_branch
        %176 = sbr.rel (%p174) target = $region20
      $region19: #{conv_block.2} parent=11 // pred_region
        _
      $region20: #{conv_block.2} parent=11 // pred_fallthru
        _
    $region12: #{conv_block.2} parent=5 // pred_fallthru
      _
    %p177 = scmp.lt.s32.totalorder %s11, 2
    // Predicated region
    $region21: #{conv_block.2} parent=5 // pred_check
      %p178 = pneg %p177
    $region22: #{conv_block.2} parent=5 // pred_check_branch
      %180 = sbr.rel (%p178) target = $region24
    $region23: #{conv_block.2} parent=5 // pred_region
      // Predicated region
      $region25: #{conv_block.2} parent=23 // pred_check
        %p181 = pneg %p69
      $region26: #{conv_block.2} parent=23 // pred_check_branch
        %183 = sbr.rel (%p181) target = $region28
      $region27: #{conv_block.2} parent=23 // pred_region
        %p184 = scmp.lt.s32.totalorder %s18, 1
        %s185 = scalar_select %p184, %s18, 1
        %s186 = smul.addr %s185, 3
        %s187 = smul.addr %s186, 4
        %s188 = scalar_lea.vmem %s1, %s187
      $region28: #{conv_block.2} parent=23 // pred_fallthru
        _
    $region24: #{conv_block.2} parent=5 // pred_fallthru
      _
    %p189 = scmp.le.s32.totalorder 1, %s11
    %p190 = scmp.lt.s32.totalorder %s11, 3
    %p191 = pnand %p189, %p190
    %p192 = pneg %p191
    // Predicated region
    $region29: #{conv_block.2} parent=5 // pred_check
      _
    $region30: #{conv_block.2} parent=5 // pred_check_branch
      %194 = sbr.rel (%p191) target = $region32
    $region31: #{conv_block.2} parent=5 // pred_region
      %s195 = ssub.s32 %s11, 1
      %p196 = scmp.lt.s32.totalorder %s21, 0
      %s197 = scalar_select %p196, %s21, 0
      %s198 = smul.addr %s197, 8
      %s199 = scalar_lea.vmem %s0, %s198
      %p200 = pneg %p49
      %p201 = pneg %p46
      %p202 = scmp.lt.s32.totalorder %s20, 1
      %s203 = scalar_select %p202, %s20, 1
      %s204 = smul.addr %s203, 3
      %s205 = smul.addr %s204, 4
      %s206 = scalar_lea.vmem %s1, %s205
      %p207 = pneg %p75
      %p208 = pneg %p72
      %p209 = pneg %p96
      %p210 = pneg %p93
      %p211 = pneg %p124
      %p212 = pneg %p121
      %p213 = scmp.lt.s32.totalorder %s20, 1
      %s214 = scalar_select %p213, %s20, 1
      %p215 = scmp.lt.s32.totalorder %s21, 0
      %s216 = scalar_select %p215, %s21, 0
      %s217 = smul.addr %s216, 3
      %s218 = smul.addr %s214, 3
      %s219 = sadd.s32 %s217, %s218
      %s220 = smul.addr %s219, 8
      %s221 = scalar_lea.vmem %s3, %s220
      %p222 = pneg %p152
      %p223 = pneg %p149
      %p224 = scmp.lt.s32.totalorder %s20, 1
      %s225 = scalar_select %p224, %s20, 1
      %p226 = scmp.lt.s32.totalorder %s21, 0
      %s227 = scalar_select %p226, %s21, 0
      %s228 = smul.addr %s225, 2
      %s229 = sadd.s32 %s227, %s228
      %s230 = smul.addr %s229, 8
      %s231 = scalar_lea.vmem %s4, %s230
      %p232 = scmp.lt.s32.totalorder %s21, 0
      %s233 = scalar_select %p232, %s21, 0
      %s234 = smul.addr %s233, 8
      %s235 = scalar_lea.vmem %s0, %s234
      %p236 = scmp.lt.s32.totalorder %s20, 1
      %s237 = scalar_select %p236, %s20, 1
      %s238 = smul.addr %s237, 3
      %s239 = smul.addr %s238, 4
      %s240 = scalar_lea.vmem %s1, %s239
      %p241 = scmp.lt.s32.totalorder %s20, 1
      %s242 = scalar_select %p241, %s20, 1
      %p243 = scmp.lt.s32.totalorder %s21, 0
      %s244 = scalar_select %p243, %s21, 0
      %s245 = smul.addr %s244, 3
      %s246 = smul.addr %s242, 3
      %s247 = sadd.s32 %s245, %s246
      %s248 = smul.addr %s247, 8
      %s249 = scalar_lea.vmem %s3, %s248
      %p250 = scmp.lt.s32.totalorder %s20, 1
      %s251 = scalar_select %p250, %s20, 1
      %p252 = scmp.lt.s32.totalorder %s21, 0
      %s253 = scalar_select %p252, %s21, 0
      %s254 = smul.addr %s251, 2
      %s255 = sadd.s32 %s253, %s254
      %s256 = smul.addr %s255, 8
      %s257 = scalar_lea.vmem %s4, %s256
      %v258 = vld [vmem:[%s235] sm:$0xff]
      %v259 = vld [vmem:[%s240] sm:$0xff]
      %v260 = vld [vmem:[%s240 + $0x8] sm:$0xf]
      %s261 = scalar_lea.vmem %s235, 8
      %v262 = vld [vmem:[%s261] sm:$0xff]
      %265 = vst [vmem:[#allocation1] ss:$2 sm:$0xff] %v259
      %s266 = scalar_lea.vmem [#allocation1], 16
      %267 = vst [vmem:[%s266] ss:$2 sm:$0xff] %v260
      %v268 = vld.sshfl [vmem:[#allocation1] sm:$0xff pattern:$0x75316420]
      %v269 = vld.sshfl [vmem:[#allocation1 + $0x8] sm:$0xff pattern:$0x75316420]
      %v270 = vld.sshfl [vmem:[#allocation1 + $0x10] sm:$0xff pattern:$0x75316420]
      %271 = vrot.lane.b32.xlu0 %v268, 127
      %v272 = vpop.permute.xlu0 %271
      %273 = vrot.lane.b32.xlu0 %v269, 127
      %v274 = vpop.permute.xlu0 %273
      %275 = vrot.lane.b32.xlu0 %v270, 127
      %v276 = vpop.permute.xlu0 %275
      %vm277 = vcmask 1039360
      %v278 = vsel %vm277, %v272, %v274
      %v279 = vsel %vm277, %v274, %v276
      %vm280 = vcmask 31744
      %v282 = vsel %vm280, %v262, 0
      %vm284 = vcmask 1043456
      %v285 = vsel %vm284, %v278, 0
      %v287 = vsel %vm284, %v279, 0
      %v289 = vsel %vm284, %v276, 0
      %291 = vmatpush.msra.mxu0 0.0
      %292 = vmatpush.msra.mxu0 0.0
      %293 = vmatpush.msra.mxu0 0.0
      %294 = vmatpush.msra.mxu0 0.0
      %295 = vmatpush.msra.mxu0 0.0
      %296 = vmatpush.msra.mxu0 0.0
      %297 = vmatpush.msra.mxu0 0.0
      %298 = vmatpush.msra.mxu0 0.0
      %299 = vmatpush.msra.mxu0 0.0
      %300 = vmatpush.msra.mxu0 0.0
      %301 = vmatpush.msra.mxu0 0.0
      %302 = vmatpush.msra.mxu0 0.0
      %303 = vmatpush.msra.mxu0 0.0
      %304 = vmatpush.msra.mxu0 0.0
      %305 = vmatpush.msra.mxu0 0.0
      %306 = vmatpush.msra.mxu0 %v285
      %307 = vmatmul.f32.gmra.mxu0 %v282
      %v308 = vpop.f32.mrf.mxu0
      %v309 = vadd.f32 0.0, %v308
      %310 = vdwg.mxu0
      %311 = vmatpush.msra.mxu0 0.0
      %312 = vmatpush.msra.mxu0 0.0
      %313 = vmatpush.msra.mxu0 0.0
      %314 = vmatpush.msra.mxu0 0.0
      %315 = vmatpush.msra.mxu0 0.0
      %316 = vmatpush.msra.mxu0 0.0
      %317 = vmatpush.msra.mxu0 0.0
      %318 = vmatpush.msra.mxu0 0.0
      %319 = vmatpush.msra.mxu0 0.0
      %320 = vmatpush.msra.mxu0 0.0
      %321 = vmatpush.msra.mxu0 0.0
      %322 = vmatpush.msra.mxu0 0.0
      %323 = vmatpush.msra.mxu0 0.0
      %324 = vmatpush.msra.mxu0 0.0
      %325 = vmatpush.msra.mxu0 0.0
      %326 = vmatpush.msra.mxu0 %v287
      %327 = vmatmul.f32.gmra.mxu0 %v282
      %v328 = vpop.f32.mrf.mxu0
      %v329 = vadd.f32 0.0, %v328
      %330 = vdwg.mxu0
      %331 = vmatpush.msra.mxu0 0.0
      %332 = vmatpush.msra.mxu0 0.0
      %333 = vmatpush.msra.mxu0 0.0
      %334 = vmatpush.msra.mxu0 0.0
      %335 = vmatpush.msra.mxu0 0.0
      %336 = vmatpush.msra.mxu0 0.0
      %337 = vmatpush.msra.mxu0 0.0
      %338 = vmatpush.msra.mxu0 0.0
      %339 = vmatpush.msra.mxu0 0.0
      %340 = vmatpush.msra.mxu0 0.0
      %341 = vmatpush.msra.mxu0 0.0
      %342 = vmatpush.msra.mxu0 0.0
      %343 = vmatpush.msra.mxu0 0.0
      %344 = vmatpush.msra.mxu0 0.0
      %345 = vmatpush.msra.mxu0 0.0
      %346 = vmatpush.msra.mxu0 %v289
      %347 = vmatmul.f32.gmra.mxu0 %v282
      %v348 = vpop.f32.mrf.mxu0
      %v349 = vadd.f32 0.0, %v348
      %350 = vdwg.mxu0
      %351 = vst [vmem:[#allocation1] ss:$2 sm:$0xff] %v259
      %s352 = scalar_lea.vmem [#allocation1], 16
      %353 = vst [vmem:[%s352] ss:$2 sm:$0xff] %v260
      %v354 = vld.sshfl [vmem:[#allocation1] sm:$0xff pattern:$0x75316420]
      %v355 = vld.sshfl [vmem:[#allocation1 + $0x8] sm:$0xff pattern:$0x75316420]
      %v356 = vld.sshfl [vmem:[#allocation1 + $0x10] sm:$0xff pattern:$0x75316420]
      %v358 = vsel %vm280, %v258, 0
      %v360 = vsel %vm284, %v354, 0
      %v362 = vsel %vm284, %v355, 0
      %v364 = vsel %vm284, %v356, 0
      %366 = vmatpush.msra.mxu0 0.0
      %367 = vmatpush.msra.mxu0 0.0
      %368 = vmatpush.msra.mxu0 0.0
      %369 = vmatpush.msra.mxu0 0.0
      %370 = vmatpush.msra.mxu0 0.0
      %371 = vmatpush.msra.mxu0 0.0
      %372 = vmatpush.msra.mxu0 0.0
      %373 = vmatpush.msra.mxu0 0.0
      %374 = vmatpush.msra.mxu0 0.0
      %375 = vmatpush.msra.mxu0 0.0
      %376 = vmatpush.msra.mxu0 0.0
      %377 = vmatpush.msra.mxu0 0.0
      %378 = vmatpush.msra.mxu0 0.0
      %379 = vmatpush.msra.mxu0 0.0
      %380 = vmatpush.msra.mxu0 0.0
      %381 = vmatpush.msra.mxu0 %v360
      %382 = vmatmul.f32.gmra.mxu0 %v358
      %v383 = vpop.f32.mrf.mxu0
      %v384 = vadd.f32 %v309, %v383
      %385 = vdwg.mxu0
      %386 = vmatpush.msra.mxu0 0.0
      %387 = vmatpush.msra.mxu0 0.0
      %388 = vmatpush.msra.mxu0 0.0
      %389 = vmatpush.msra.mxu0 0.0
      %390 = vmatpush.msra.mxu0 0.0
      %391 = vmatpush.msra.mxu0 0.0
      %392 = vmatpush.msra.mxu0 0.0
      %393 = vmatpush.msra.mxu0 0.0
      %394 = vmatpush.msra.mxu0 0.0
      %395 = vmatpush.msra.mxu0 0.0
      %396 = vmatpush.msra.mxu0 0.0
      %397 = vmatpush.msra.mxu0 0.0
      %398 = vmatpush.msra.mxu0 0.0
      %399 = vmatpush.msra.mxu0 0.0
      %400 = vmatpush.msra.mxu0 0.0
      %401 = vmatpush.msra.mxu0 %v362
      %402 = vmatmul.f32.gmra.mxu0 %v358
      %v403 = vpop.f32.mrf.mxu0
      %v404 = vadd.f32 %v329, %v403
      %405 = vdwg.mxu0
      %406 = vmatpush.msra.mxu0 0.0
      %407 = vmatpush.msra.mxu0 0.0
      %408 = vmatpush.msra.mxu0 0.0
      %409 = vmatpush.msra.mxu0 0.0
      %410 = vmatpush.msra.mxu0 0.0
      %411 = vmatpush.msra.mxu0 0.0
      %412 = vmatpush.msra.mxu0 0.0
      %413 = vmatpush.msra.mxu0 0.0
      %414 = vmatpush.msra.mxu0 0.0
      %415 = vmatpush.msra.mxu0 0.0
      %416 = vmatpush.msra.mxu0 0.0
      %417 = vmatpush.msra.mxu0 0.0
      %418 = vmatpush.msra.mxu0 0.0
      %419 = vmatpush.msra.mxu0 0.0
      %420 = vmatpush.msra.mxu0 0.0
      %421 = vmatpush.msra.mxu0 %v364
      %422 = vmatmul.f32.gmra.mxu0 %v358
      %v423 = vpop.f32.mrf.mxu0
      %v424 = vadd.f32 %v349, %v423
      %425 = vdwg.mxu0
      %s426 = scalar_lea.vmem %s235, 16
      %v427 = vld [vmem:[%s426] sm:$0xff]
      %v428 = vld [vmem:[%s240] sm:$0xff]
      %v429 = vld [vmem:[%s240 + $0x8] sm:$0xf]
      %432 = vst [vmem:[#allocation1] ss:$2 sm:$0xff] %v428
      %s433 = scalar_lea.vmem [#allocation1], 16
      %434 = vst [vmem:[%s433] ss:$2 sm:$0xff] %v429
      %v435 = vld.sshfl [vmem:[#allocation1] sm:$0xff pattern:$0x75316420]
      %v436 = vld.sshfl [vmem:[#allocation1 + $0x8] sm:$0xff pattern:$0x75316420]
      %v437 = vld.sshfl [vmem:[#allocation1 + $0x10] sm:$0xff pattern:$0x75316420]
      %438 = vrot.lane.b32.xlu0 %v435, 126
      %v439 = vpop.permute.xlu0 %438
      %440 = vrot.lane.b32.xlu0 %v436, 126
      %v441 = vpop.permute.xlu0 %440
      %442 = vrot.lane.b32.xlu0 %v437, 126
      %v443 = vpop.permute.xlu0 %442
      %vm444 = vcmask 1031168
      %v445 = vsel %vm444, %v439, %v441
      %v446 = vsel %vm444, %v441, %v443
      %v448 = vsel %vm280, %v427, 0
      %v450 = vsel %vm284, %v445, 0
      %v452 = vsel %vm284, %v446, 0
      %v454 = vsel %vm284, %v443, 0
      %456 = vmatpush.msra.mxu0 0.0
      %457 = vmatpush.msra.mxu0 0.0
      %458 = vmatpush.msra.mxu0 0.0
      %459 = vmatpush.msra.mxu0 0.0
      %460 = vmatpush.msra.mxu0 0.0
      %461 = vmatpush.msra.mxu0 0.0
      %462 = vmatpush.msra.mxu0 0.0
      %463 = vmatpush.msra.mxu0 0.0
      %464 = vmatpush.msra.mxu0 0.0
      %465 = vmatpush.msra.mxu0 0.0
      %466 = vmatpush.msra.mxu0 0.0
      %467 = vmatpush.msra.mxu0 0.0
      %468 = vmatpush.msra.mxu0 0.0
      %469 = vmatpush.msra.mxu0 0.0
      %470 = vmatpush.msra.mxu0 0.0
      %471 = vmatpush.msra.mxu0 %v450
      %472 = vmatmul.f32.gmra.mxu0 %v448
      %v473 = vpop.f32.mrf.mxu0
      %v474 = vadd.f32 0.0, %v473
      %475 = vdwg.mxu0
      %476 = vmatpush.msra.mxu0 0.0
      %477 = vmatpush.msra.mxu0 0.0
      %478 = vmatpush.msra.mxu0 0.0
      %479 = vmatpush.msra.mxu0 0.0
      %480 = vmatpush.msra.mxu0 0.0
      %481 = vmatpush.msra.mxu0 0.0
      %482 = vmatpush.msra.mxu0 0.0
      %483 = vmatpush.msra.mxu0 0.0
      %484 = vmatpush.msra.mxu0 0.0
      %485 = vmatpush.msra.mxu0 0.0
      %486 = vmatpush.msra.mxu0 0.0
      %487 = vmatpush.msra.mxu0 0.0
      %488 = vmatpush.msra.mxu0 0.0
      %489 = vmatpush.msra.mxu0 0.0
      %490 = vmatpush.msra.mxu0 0.0
      %491 = vmatpush.msra.mxu0 %v452
      %492 = vmatmul.f32.gmra.mxu0 %v448
      %v493 = vpop.f32.mrf.mxu0
      %v494 = vadd.f32 0.0, %v493
      %495 = vdwg.mxu0
      %496 = vmatpush.msra.mxu0 0.0
      %497 = vmatpush.msra.mxu0 0.0
      %498 = vmatpush.msra.mxu0 0.0
      %499 = vmatpush.msra.mxu0 0.0
      %500 = vmatpush.msra.mxu0 0.0
      %501 = vmatpush.msra.mxu0 0.0
      %502 = vmatpush.msra.mxu0 0.0
      %503 = vmatpush.msra.mxu0 0.0
      %504 = vmatpush.msra.mxu0 0.0
      %505 = vmatpush.msra.mxu0 0.0
      %506 = vmatpush.msra.mxu0 0.0
      %507 = vmatpush.msra.mxu0 0.0
      %508 = vmatpush.msra.mxu0 0.0
      %509 = vmatpush.msra.mxu0 0.0
      %510 = vmatpush.msra.mxu0 0.0
      %511 = vmatpush.msra.mxu0 %v454
      %512 = vmatmul.f32.gmra.mxu0 %v448
      %v513 = vpop.f32.mrf.mxu0
      %v514 = vadd.f32 0.0, %v513
      %515 = vdwg.mxu0
      %v516 = vadd.f32 %v384, %v474
      %v517 = vadd.f32 %v404, %v494
      %v518 = vadd.f32 %v424, %v514
      %s519 = scalar_lea.vmem %s235, 24
      %v520 = vld [vmem:[%s519] sm:$0xff]
      %v521 = vld [vmem:[%s240] sm:$0xff]
      %v522 = vld [vmem:[%s240 + $0x8] sm:$0xf]
      %525 = vst [vmem:[#allocation1] ss:$2 sm:$0xff] %v521
      %s526 = scalar_lea.vmem [#allocation1], 16
      %527 = vst [vmem:[%s526] ss:$2 sm:$0xff] %v522
      %v528 = vld.sshfl [vmem:[#allocation1] sm:$0xff pattern:$0x75316420]
      %v529 = vld.sshfl [vmem:[#allocation1 + $0x8] sm:$0xff pattern:$0x75316420]
      %v530 = vld.sshfl [vmem:[#allocation1 + $0x10] sm:$0xff pattern:$0x75316420]
      %531 = vrot.lane.b32.xlu0 %v528, 110
      %v532 = vpop.permute.xlu0 %531
      %533 = vrot.lane.b32.xlu0 %v529, 110
      %v534 = vpop.permute.xlu0 %533
      %535 = vrot.lane.b32.xlu0 %v530, 110
      %v536 = vpop.permute.xlu0 %535
      %vm537 = vcmask 900096
      %v538 = vsel %vm537, %v532, %v534
      %v539 = vsel %vm537, %v534, %v536
      %v541 = vsel %vm280, %v520, 0
      %v543 = vsel %vm284, %v538, 0
      %v545 = vsel %vm284, %v539, 0
      %v547 = vsel %vm284, %v536, 0
      %549 = vmatpush.msra.mxu0 0.0
      %550 = vmatpush.msra.mxu0 0.0
      %551 = vmatpush.msra.mxu0 0.0
      %552 = vmatpush.msra.mxu0 0.0
      %553 = vmatpush.msra.mxu0 0.0
      %554 = vmatpush.msra.mxu0 0.0
      %555 = vmatpush.msra.mxu0 0.0
      %556 = vmatpush.msra.mxu0 0.0
      %557 = vmatpush.msra.mxu0 0.0
      %558 = vmatpush.msra.mxu0 0.0
      %559 = vmatpush.msra.mxu0 0.0
      %560 = vmatpush.msra.mxu0 0.0
      %561 = vmatpush.msra.mxu0 0.0
      %562 = vmatpush.msra.mxu0 0.0
      %563 = vmatpush.msra.mxu0 0.0
      %564 = vmatpush.msra.mxu0 %v543
      %565 = vmatmul.f32.gmra.mxu0 %v541
      %v566 = vpop.f32.mrf.mxu0
      %v567 = vadd.f32 0.0, %v566
      %568 = vdwg.mxu0
      %569 = vmatpush.msra.mxu0 0.0
      %570 = vmatpush.msra.mxu0 0.0
      %571 = vmatpush.msra.mxu0 0.0
      %572 = vmatpush.msra.mxu0 0.0
      %573 = vmatpush.msra.mxu0 0.0
      %574 = vmatpush.msra.mxu0 0.0
      %575 = vmatpush.msra.mxu0 0.0
      %576 = vmatpush.msra.mxu0 0.0
      %577 = vmatpush.msra.mxu0 0.0
      %578 = vmatpush.msra.mxu0 0.0
      %579 = vmatpush.msra.mxu0 0.0
      %580 = vmatpush.msra.mxu0 0.0
      %581 = vmatpush.msra.mxu0 0.0
      %582 = vmatpush.msra.mxu0 0.0
      %583 = vmatpush.msra.mxu0 0.0
      %584 = vmatpush.msra.mxu0 %v545
      %585 = vmatmul.f32.gmra.mxu0 %v541
      %v586 = vpop.f32.mrf.mxu0
      %v587 = vadd.f32 0.0, %v586
      %588 = vdwg.mxu0
      %589 = vmatpush.msra.mxu0 0.0
      %590 = vmatpush.msra.mxu0 0.0
      %591 = vmatpush.msra.mxu0 0.0
      %592 = vmatpush.msra.mxu0 0.0
      %593 = vmatpush.msra.mxu0 0.0
      %594 = vmatpush.msra.mxu0 0.0
      %595 = vmatpush.msra.mxu0 0.0
      %596 = vmatpush.msra.mxu0 0.0
      %597 = vmatpush.msra.mxu0 0.0
      %598 = vmatpush.msra.mxu0 0.0
      %599 = vmatpush.msra.mxu0 0.0
      %600 = vmatpush.msra.mxu0 0.0
      %601 = vmatpush.msra.mxu0 0.0
      %602 = vmatpush.msra.mxu0 0.0
      %603 = vmatpush.msra.mxu0 0.0
      %604 = vmatpush.msra.mxu0 %v547
      %605 = vmatmul.f32.gmra.mxu0 %v541
      %v606 = vpop.f32.mrf.mxu0
      %v607 = vadd.f32 0.0, %v606
      %608 = vdwg.mxu0
      %v609 = vadd.f32 %v516, %v567
      %v610 = vadd.f32 %v517, %v587
      %v611 = vadd.f32 %v518, %v607
      %s612 = scalar_lea.vmem %s235, 32
      %v613 = vld [vmem:[%s612] sm:$0xff]
      %v614 = vld [vmem:[%s240] sm:$0xff]
      %v615 = vld [vmem:[%s240 + $0x8] sm:$0xf]
      %618 = vst [vmem:[#allocation1] ss:$2 sm:$0xff] %v614
      %s619 = scalar_lea.vmem [#allocation1], 16
      %620 = vst [vmem:[%s619] ss:$2 sm:$0xff] %v615
      %v621 = vld.sshfl [vmem:[#allocation1] sm:$0xff pattern:$0x75316420]
      %v622 = vld.sshfl [vmem:[#allocation1 + $0x8] sm:$0xff pattern:$0x75316420]
      %v623 = vld.sshfl [vmem:[#allocation1 + $0x10] sm:$0xff pattern:$0x75316420]
      %624 = vrot.lane.b32.xlu0 %v621, 109
      %v625 = vpop.permute.xlu0 %624
      %626 = vrot.lane.b32.xlu0 %v622, 109
      %v627 = vpop.permute.xlu0 %626
      %628 = vrot.lane.b32.xlu0 %v623, 109
      %v629 = vpop.permute.xlu0 %628
      %vm630 = vcmask 891904
      %v631 = vsel %vm630, %v625, %v627
      %v632 = vsel %vm630, %v627, %v629
      %v634 = vsel %vm280, %v613, 0
      %v636 = vsel %vm284, %v631, 0
      %v638 = vsel %vm284, %v632, 0
      %v640 = vsel %vm284, %v629, 0
      %642 = vmatpush.msra.mxu0 0.0
      %643 = vmatpush.msra.mxu0 0.0
      %644 = vmatpush.msra.mxu0 0.0
      %645 = vmatpush.msra.mxu0 0.0
      %646 = vmatpush.msra.mxu0 0.0
      %647 = vmatpush.msra.mxu0 0.0
      %648 = vmatpush.msra.mxu0 0.0
      %649 = vmatpush.msra.mxu0 0.0
      %650 = vmatpush.msra.mxu0 0.0
      %651 = vmatpush.msra.mxu0 0.0
      %652 = vmatpush.msra.mxu0 0.0
      %653 = vmatpush.msra.mxu0 0.0
      %654 = vmatpush.msra.mxu0 0.0
      %655 = vmatpush.msra.mxu0 0.0
      %656 = vmatpush.msra.mxu0 0.0
      %657 = vmatpush.msra.mxu0 %v636
      %658 = vmatmul.f32.gmra.mxu0 %v634
      %v659 = vpop.f32.mrf.mxu0
      %v660 = vadd.f32 0.0, %v659
      %661 = vdwg.mxu0
      %662 = vmatpush.msra.mxu0 0.0
      %663 = vmatpush.msra.mxu0 0.0
      %664 = vmatpush.msra.mxu0 0.0
      %665 = vmatpush.msra.mxu0 0.0
      %666 = vmatpush.msra.mxu0 0.0
      %667 = vmatpush.msra.mxu0 0.0
      %668 = vmatpush.msra.mxu0 0.0
      %669 = vmatpush.msra.mxu0 0.0
      %670 = vmatpush.msra.mxu0 0.0
      %671 = vmatpush.msra.mxu0 0.0
      %672 = vmatpush.msra.mxu0 0.0
      %673 = vmatpush.msra.mxu0 0.0
      %674 = vmatpush.msra.mxu0 0.0
      %675 = vmatpush.msra.mxu0 0.0
      %676 = vmatpush.msra.mxu0 0.0
      %677 = vmatpush.msra.mxu0 %v638
      %678 = vmatmul.f32.gmra.mxu0 %v634
      %v679 = vpop.f32.mrf.mxu0
      %v680 = vadd.f32 0.0, %v679
      %681 = vdwg.mxu0
      %682 = vmatpush.msra.mxu0 0.0
      %683 = vmatpush.msra.mxu0 0.0
      %684 = vmatpush.msra.mxu0 0.0
      %685 = vmatpush.msra.mxu0 0.0
      %686 = vmatpush.msra.mxu0 0.0
      %687 = vmatpush.msra.mxu0 0.0
      %688 = vmatpush.msra.mxu0 0.0
      %689 = vmatpush.msra.mxu0 0.0
      %690 = vmatpush.msra.mxu0 0.0
      %691 = vmatpush.msra.mxu0 0.0
      %692 = vmatpush.msra.mxu0 0.0
      %693 = vmatpush.msra.mxu0 0.0
      %694 = vmatpush.msra.mxu0 0.0
      %695 = vmatpush.msra.mxu0 0.0
      %696 = vmatpush.msra.mxu0 0.0
      %697 = vmatpush.msra.mxu0 %v640
      %698 = vmatmul.f32.gmra.mxu0 %v634
      %v699 = vpop.f32.mrf.mxu0
      %v700 = vadd.f32 0.0, %v699
      %701 = vdwg.mxu0
      %v702 = vadd.f32 %v609, %v660
      %v703 = vadd.f32 %v610, %v680
      %v704 = vadd.f32 %v611, %v700
      %s705 = scalar_lea.vmem %s235, 40
      %v706 = vld [vmem:[%s705] sm:$0xff]
      %v707 = vld [vmem:[%s240] sm:$0xff]
      %v708 = vld [vmem:[%s240 + $0x8] sm:$0xf]
      %711 = vst [vmem:[#allocation1] ss:$2 sm:$0xff] %v707
      %s712 = scalar_lea.vmem [#allocation1], 16
      %713 = vst [vmem:[%s712] ss:$2 sm:$0xff] %v708
      %v714 = vld.sshfl [vmem:[#allocation1] sm:$0xff pattern:$0x75316420]
      %v715 = vld.sshfl [vmem:[#allocation1 + $0x8] sm:$0xff pattern:$0x75316420]
      %v716 = vld.sshfl [vmem:[#allocation1 + $0x10] sm:$0xff pattern:$0x75316420]
      %717 = vrot.lane.b32.xlu0 %v714, 108
      %v718 = vpop.permute.xlu0 %717
      %719 = vrot.lane.b32.xlu0 %v715, 108
      %v720 = vpop.permute.xlu0 %719
      %721 = vrot.lane.b32.xlu0 %v716, 108
      %v722 = vpop.permute.xlu0 %721
      %vm723 = vcmask 883712
      %v724 = vsel %vm723, %v718, %v720
      %v725 = vsel %vm723, %v720, %v722
      %v727 = vsel %vm280, %v706, 0
      %v729 = vsel %vm284, %v724, 0
      %v731 = vsel %vm284, %v725, 0
      %v733 = vsel %vm284, %v722, 0
      %735 = vmatpush.msra.mxu0 0.0
      %736 = vmatpush.msra.mxu0 0.0
      %737 = vmatpush.msra.mxu0 0.0
      %738 = vmatpush.msra.mxu0 0.0
      %739 = vmatpush.msra.mxu0 0.0
      %740 = vmatpush.msra.mxu0 0.0
      %741 = vmatpush.msra.mxu0 0.0
      %742 = vmatpush.msra.mxu0 0.0
      %743 = vmatpush.msra.mxu0 0.0
      %744 = vmatpush.msra.mxu0 0.0
      %745 = vmatpush.msra.mxu0 0.0
      %746 = vmatpush.msra.mxu0 0.0
      %747 = vmatpush.msra.mxu0 0.0
      %748 = vmatpush.msra.mxu0 0.0
      %749 = vmatpush.msra.mxu0 0.0
      %750 = vmatpush.msra.mxu0 %v729
      %751 = vmatmul.f32.gmra.mxu0 %v727
      %v752 = vpop.f32.mrf.mxu0
      %v753 = vadd.f32 0.0, %v752
      %754 = vdwg.mxu0
      %755 = vmatpush.msra.mxu0 0.0
      %756 = vmatpush.msra.mxu0 0.0
      %757 = vmatpush.msra.mxu0 0.0
      %758 = vmatpush.msra.mxu0 0.0
      %759 = vmatpush.msra.mxu0 0.0
      %760 = vmatpush.msra.mxu0 0.0
      %761 = vmatpush.msra.mxu0 0.0
      %762 = vmatpush.msra.mxu0 0.0
      %763 = vmatpush.msra.mxu0 0.0
      %764 = vmatpush.msra.mxu0 0.0
      %765 = vmatpush.msra.mxu0 0.0
      %766 = vmatpush.msra.mxu0 0.0
      %767 = vmatpush.msra.mxu0 0.0
      %768 = vmatpush.msra.mxu0 0.0
      %769 = vmatpush.msra.mxu0 0.0
      %770 = vmatpush.msra.mxu0 %v731
      %771 = vmatmul.f32.gmra.mxu0 %v727
      %v772 = vpop.f32.mrf.mxu0
      %v773 = vadd.f32 0.0, %v772
      %774 = vdwg.mxu0
      %775 = vmatpush.msra.mxu0 0.0
      %776 = vmatpush.msra.mxu0 0.0
      %777 = vmatpush.msra.mxu0 0.0
      %778 = vmatpush.msra.mxu0 0.0
      %779 = vmatpush.msra.mxu0 0.0
      %780 = vmatpush.msra.mxu0 0.0
      %781 = vmatpush.msra.mxu0 0.0
      %782 = vmatpush.msra.mxu0 0.0
      %783 = vmatpush.msra.mxu0 0.0
      %784 = vmatpush.msra.mxu0 0.0
      %785 = vmatpush.msra.mxu0 0.0
      %786 = vmatpush.msra.mxu0 0.0
      %787 = vmatpush.msra.mxu0 0.0
      %788 = vmatpush.msra.mxu0 0.0
      %789 = vmatpush.msra.mxu0 0.0
      %790 = vmatpush.msra.mxu0 %v733
      %791 = vmatmul.f32.gmra.mxu0 %v727
      %v792 = vpop.f32.mrf.mxu0
      %v793 = vadd.f32 0.0, %v792
      %794 = vdwg.mxu0
      %v795 = vadd.f32 %v702, %v753
      %v796 = vadd.f32 %v703, %v773
      %v797 = vadd.f32 %v704, %v793
      %s798 = scalar_lea.vmem %s235, 48
      %v799 = vld [vmem:[%s798] sm:$0xff]
      %v800 = vld [vmem:[%s240] sm:$0xff]
      %v801 = vld [vmem:[%s240 + $0x8] sm:$0xf]
      %804 = vst [vmem:[#allocation1] ss:$2 sm:$0xff] %v800
      %s805 = scalar_lea.vmem [#allocation1], 16
      %806 = vst [vmem:[%s805] ss:$2 sm:$0xff] %v801
      %v807 = vld.sshfl [vmem:[#allocation1] sm:$0xff pattern:$0x75316420]
      %v808 = vld.sshfl [vmem:[#allocation1 + $0x8] sm:$0xff pattern:$0x75316420]
      %v809 = vld.sshfl [vmem:[#allocation1 + $0x10] sm:$0xff pattern:$0x75316420]
      %810 = vrot.lane.b32.xlu0 %v807, 92
      %v811 = vpop.permute.xlu0 %810
      %812 = vrot.lane.b32.xlu0 %v808, 92
      %v813 = vpop.permute.xlu0 %812
      %814 = vrot.lane.b32.xlu0 %v809, 92
      %v815 = vpop.permute.xlu0 %814
      %vm816 = vcmask 752640
      %v817 = vsel %vm816, %v811, %v813
      %v818 = vsel %vm816, %v813, %v815
      %v820 = vsel %vm280, %v799, 0
      %v822 = vsel %vm284, %v817, 0
      %v824 = vsel %vm284, %v818, 0
      %v826 = vsel %vm284, %v815, 0
      %828 = vmatpush.msra.mxu0 0.0
      %829 = vmatpush.msra.mxu0 0.0
      %830 = vmatpush.msra.mxu0 0.0
      %831 = vmatpush.msra.mxu0 0.0
      %832 = vmatpush.msra.mxu0 0.0
      %833 = vmatpush.msra.mxu0 0.0
      %834 = vmatpush.msra.mxu0 0.0
      %835 = vmatpush.msra.mxu0 0.0
      %836 = vmatpush.msra.mxu0 0.0
      %837 = vmatpush.msra.mxu0 0.0
      %838 = vmatpush.msra.mxu0 0.0
      %839 = vmatpush.msra.mxu0 0.0
      %840 = vmatpush.msra.mxu0 0.0
      %841 = vmatpush.msra.mxu0 0.0
      %842 = vmatpush.msra.mxu0 0.0
      %843 = vmatpush.msra.mxu0 %v822
      %844 = vmatmul.f32.gmra.mxu0 %v820
      %v845 = vpop.f32.mrf.mxu0
      %v846 = vadd.f32 0.0, %v845
      %847 = vdwg.mxu0
      %848 = vmatpush.msra.mxu0 0.0
      %849 = vmatpush.msra.mxu0 0.0
      %850 = vmatpush.msra.mxu0 0.0
      %851 = vmatpush.msra.mxu0 0.0
      %852 = vmatpush.msra.mxu0 0.0
      %853 = vmatpush.msra.mxu0 0.0
      %854 = vmatpush.msra.mxu0 0.0
      %855 = vmatpush.msra.mxu0 0.0
      %856 = vmatpush.msra.mxu0 0.0
      %857 = vmatpush.msra.mxu0 0.0
      %858 = vmatpush.msra.mxu0 0.0
      %859 = vmatpush.msra.mxu0 0.0
      %860 = vmatpush.msra.mxu0 0.0
      %861 = vmatpush.msra.mxu0 0.0
      %862 = vmatpush.msra.mxu0 0.0
      %863 = vmatpush.msra.mxu0 %v824
      %864 = vmatmul.f32.gmra.mxu0 %v820
      %v865 = vpop.f32.mrf.mxu0
      %v866 = vadd.f32 0.0, %v865
      %867 = vdwg.mxu0
      %868 = vmatpush.msra.mxu0 0.0
      %869 = vmatpush.msra.mxu0 0.0
      %870 = vmatpush.msra.mxu0 0.0
      %871 = vmatpush.msra.mxu0 0.0
      %872 = vmatpush.msra.mxu0 0.0
      %873 = vmatpush.msra.mxu0 0.0
      %874 = vmatpush.msra.mxu0 0.0
      %875 = vmatpush.msra.mxu0 0.0
      %876 = vmatpush.msra.mxu0 0.0
      %877 = vmatpush.msra.mxu0 0.0
      %878 = vmatpush.msra.mxu0 0.0
      %879 = vmatpush.msra.mxu0 0.0
      %880 = vmatpush.msra.mxu0 0.0
      %881 = vmatpush.msra.mxu0 0.0
      %882 = vmatpush.msra.mxu0 0.0
      %883 = vmatpush.msra.mxu0 %v826
      %884 = vmatmul.f32.gmra.mxu0 %v820
      %v885 = vpop.f32.mrf.mxu0
      %v886 = vadd.f32 0.0, %v885
      %887 = vdwg.mxu0
      %v888 = vadd.f32 %v795, %v846
      %v889 = vadd.f32 %v796, %v866
      %v890 = vadd.f32 %v797, %v886
      %s891 = scalar_lea.vmem %s235, 56
      %v892 = vld [vmem:[%s891] sm:$0xff]
      %v893 = vld [vmem:[%s240] sm:$0xff]
      %v894 = vld [vmem:[%s240 + $0x8] sm:$0xf]
      %897 = vst [vmem:[#allocation1] ss:$2 sm:$0xff] %v893
      %s898 = scalar_lea.vmem [#allocation1], 16
      %899 = vst [vmem:[%s898] ss:$2 sm:$0xff] %v894
      %v900 = vld.sshfl [vmem:[#allocation1] sm:$0xff pattern:$0x75316420]
      %v901 = vld.sshfl [vmem:[#allocation1 + $0x8] sm:$0xff pattern:$0x75316420]
      %v902 = vld.sshfl [vmem:[#allocation1 + $0x10] sm:$0xff pattern:$0x75316420]
      %903 = vrot.lane.b32.xlu0 %v900, 91
      %v904 = vpop.permute.xlu0 %903
      %905 = vrot.lane.b32.xlu0 %v901, 91
      %v906 = vpop.permute.xlu0 %905
      %907 = vrot.lane.b32.xlu0 %v902, 91
      %v908 = vpop.permute.xlu0 %907
      %vm909 = vcmask 744448
      %v910 = vsel %vm909, %v904, %v906
      %v911 = vsel %vm909, %v906, %v908
      %v913 = vsel %vm280, %v892, 0
      %v915 = vsel %vm284, %v910, 0
      %v917 = vsel %vm284, %v911, 0
      %v919 = vsel %vm284, %v908, 0
      %921 = vmatpush.msra.mxu0 0.0
      %922 = vmatpush.msra.mxu0 0.0
      %923 = vmatpush.msra.mxu0 0.0
      %924 = vmatpush.msra.mxu0 0.0
      %925 = vmatpush.msra.mxu0 0.0
      %926 = vmatpush.msra.mxu0 0.0
      %927 = vmatpush.msra.mxu0 0.0
      %928 = vmatpush.msra.mxu0 0.0
      %929 = vmatpush.msra.mxu0 0.0
      %930 = vmatpush.msra.mxu0 0.0
      %931 = vmatpush.msra.mxu0 0.0
      %932 = vmatpush.msra.mxu0 0.0
      %933 = vmatpush.msra.mxu0 0.0
      %934 = vmatpush.msra.mxu0 0.0
      %935 = vmatpush.msra.mxu0 0.0
      %936 = vmatpush.msra.mxu0 %v915
      %937 = vmatmul.f32.gmra.mxu0 %v913
      %v938 = vpop.f32.mrf.mxu0
      %v939 = vadd.f32 0.0, %v938
      %940 = vdwg.mxu0
      %941 = vmatpush.msra.mxu0 0.0
      %942 = vmatpush.msra.mxu0 0.0
      %943 = vmatpush.msra.mxu0 0.0
      %944 = vmatpush.msra.mxu0 0.0
      %945 = vmatpush.msra.mxu0 0.0
      %946 = vmatpush.msra.mxu0 0.0
      %947 = vmatpush.msra.mxu0 0.0
      %948 = vmatpush.msra.mxu0 0.0
      %949 = vmatpush.msra.mxu0 0.0
      %950 = vmatpush.msra.mxu0 0.0
      %951 = vmatpush.msra.mxu0 0.0
      %952 = vmatpush.msra.mxu0 0.0
      %953 = vmatpush.msra.mxu0 0.0
      %954 = vmatpush.msra.mxu0 0.0
      %955 = vmatpush.msra.mxu0 0.0
      %956 = vmatpush.msra.mxu0 %v917
      %957 = vmatmul.f32.gmra.mxu0 %v913
      %v958 = vpop.f32.mrf.mxu0
      %v959 = vadd.f32 0.0, %v958
      %960 = vdwg.mxu0
      %961 = vmatpush.msra.mxu0 0.0
      %962 = vmatpush.msra.mxu0 0.0
      %963 = vmatpush.msra.mxu0 0.0
      %964 = vmatpush.msra.mxu0 0.0
      %965 = vmatpush.msra.mxu0 0.0
      %966 = vmatpush.msra.mxu0 0.0
      %967 = vmatpush.msra.mxu0 0.0
      %968 = vmatpush.msra.mxu0 0.0
      %969 = vmatpush.msra.mxu0 0.0
      %970 = vmatpush.msra.mxu0 0.0
      %971 = vmatpush.msra.mxu0 0.0
      %972 = vmatpush.msra.mxu0 0.0
      %973 = vmatpush.msra.mxu0 0.0
      %974 = vmatpush.msra.mxu0 0.0
      %975 = vmatpush.msra.mxu0 0.0
      %976 = vmatpush.msra.mxu0 %v919
      %977 = vmatmul.f32.gmra.mxu0 %v913
      %v978 = vpop.f32.mrf.mxu0
      %v979 = vadd.f32 0.0, %v978
      %980 = vdwg.mxu0
      %v981 = vadd.f32 %v888, %v939
      %v982 = vadd.f32 %v889, %v959
      %v983 = vadd.f32 %v890, %v979
      %s984 = scalar_lea.vmem %s235, 64
      %v985 = vld [vmem:[%s984] sm:$0xff]
      %v986 = vld [vmem:[%s240] sm:$0xff]
      %v987 = vld [vmem:[%s240 + $0x8] sm:$0xf]
      %990 = vst [vmem:[#allocation1] ss:$2 sm:$0xff] %v986
      %s991 = scalar_lea.vmem [#allocation1], 16
      %992 = vst [vmem:[%s991] ss:$2 sm:$0xff] %v987
      %v993 = vld.sshfl [vmem:[#allocation1] sm:$0xff pattern:$0x75316420]
      %v994 = vld.sshfl [vmem:[#allocation1 + $0x8] sm:$0xff pattern:$0x75316420]
      %v995 = vld.sshfl [vmem:[#allocation1 + $0x10] sm:$0xff pattern:$0x75316420]
      %996 = vrot.lane.b32.xlu0 %v993, 90
      %v997 = vpop.permute.xlu0 %996
      %998 = vrot.lane.b32.xlu0 %v994, 90
      %v999 = vpop.permute.xlu0 %998
      %1000 = vrot.lane.b32.xlu0 %v995, 90
      %v1001 = vpop.permute.xlu0 %1000
      %vm1002 = vcmask 736256
      %v1003 = vsel %vm1002, %v997, %v999
      %v1004 = vsel %vm1002, %v999, %v1001
      %v1006 = vsel %vm280, %v985, 0
      %v1008 = vsel %vm284, %v1003, 0
      %v1010 = vsel %vm284, %v1004, 0
      %v1012 = vsel %vm284, %v1001, 0
      %1014 = vmatpush.msra.mxu0 0.0
      %1015 = vmatpush.msra.mxu0 0.0
      %1016 = vmatpush.msra.mxu0 0.0
      %1017 = vmatpush.msra.mxu0 0.0
      %1018 = vmatpush.msra.mxu0 0.0
      %1019 = vmatpush.msra.mxu0 0.0
      %1020 = vmatpush.msra.mxu0 0.0
      %1021 = vmatpush.msra.mxu0 0.0
      %1022 = vmatpush.msra.mxu0 0.0
      %1023 = vmatpush.msra.mxu0 0.0
      %1024 = vmatpush.msra.mxu0 0.0
      %1025 = vmatpush.msra.mxu0 0.0
      %1026 = vmatpush.msra.mxu0 0.0
      %1027 = vmatpush.msra.mxu0 0.0
      %1028 = vmatpush.msra.mxu0 0.0
      %1029 = vmatpush.msra.mxu0 %v1008
      %1030 = vmatmul.f32.gmra.mxu0 %v1006
      %v1031 = vpop.f32.mrf.mxu0
      %v1032 = vadd.f32 0.0, %v1031
      %1033 = vdwg.mxu0
      %1034 = vmatpush.msra.mxu0 0.0
      %1035 = vmatpush.msra.mxu0 0.0
      %1036 = vmatpush.msra.mxu0 0.0
      %1037 = vmatpush.msra.mxu0 0.0
      %1038 = vmatpush.msra.mxu0 0.0
      %1039 = vmatpush.msra.mxu0 0.0
      %1040 = vmatpush.msra.mxu0 0.0
      %1041 = vmatpush.msra.mxu0 0.0
      %1042 = vmatpush.msra.mxu0 0.0
      %1043 = vmatpush.msra.mxu0 0.0
      %1044 = vmatpush.msra.mxu0 0.0
      %1045 = vmatpush.msra.mxu0 0.0
      %1046 = vmatpush.msra.mxu0 0.0
      %1047 = vmatpush.msra.mxu0 0.0
      %1048 = vmatpush.msra.mxu0 0.0
      %1049 = vmatpush.msra.mxu0 %v1010
      %1050 = vmatmul.f32.gmra.mxu0 %v1006
      %v1051 = vpop.f32.mrf.mxu0
      %v1052 = vadd.f32 0.0, %v1051
      %1053 = vdwg.mxu0
      %1054 = vmatpush.msra.mxu0 0.0
      %1055 = vmatpush.msra.mxu0 0.0
      %1056 = vmatpush.msra.mxu0 0.0
      %1057 = vmatpush.msra.mxu0 0.0
      %1058 = vmatpush.msra.mxu0 0.0
      %1059 = vmatpush.msra.mxu0 0.0
      %1060 = vmatpush.msra.mxu0 0.0
      %1061 = vmatpush.msra.mxu0 0.0
      %1062 = vmatpush.msra.mxu0 0.0
      %1063 = vmatpush.msra.mxu0 0.0
      %1064 = vmatpush.msra.mxu0 0.0
      %1065 = vmatpush.msra.mxu0 0.0
      %1066 = vmatpush.msra.mxu0 0.0
      %1067 = vmatpush.msra.mxu0 0.0
      %1068 = vmatpush.msra.mxu0 0.0
      %1069 = vmatpush.msra.mxu0 %v1012
      %1070 = vmatmul.f32.gmra.mxu0 %v1006
      %v1071 = vpop.f32.mrf.mxu0
      %v1072 = vadd.f32 0.0, %v1071
      %1073 = vdwg.mxu0
      %v1074 = vadd.f32 %v981, %v1032
      %v1075 = vadd.f32 %v982, %v1052
      %v1076 = vadd.f32 %v983, %v1072
      %1077 = vst [vmem:[%s249] sm:$0xff] %v1074
      %1078 = vst [vmem:[%s249 + $0x8] sm:$0xff] %v1075
      %vm1079 = vcmask 261120
      %1080 = vst.msk [vmem:[%s249 + $0x10] sm:$0xff] %vm1079, %v1076
      %v1081 = vld [vmem:[%s2] sm:$0x7]
      %v1083 = vperm.slane %v1081, 0
      %v1084 = vperm.slane %v1081, 1
      %v1085 = vperm.slane %v1081, 2
      %v1089 = vmul.f32 %v1074, %v1083
      %v1090 = vmul.f32 %v1075, %v1084
      %v1091 = vmul.f32 %v1076, %v1085
      %v1092 = vadd.f32 %v1089, %v1090
      %v1093 = vsel %vm1079, %v1091, 0.0
      %v1094 = vadd.f32 %v1092, %v1093
      %1095 = vadd.xlane.f32.xlu0 %v1094
      %v1096 = vpop.xlane.xlu0 %1095
      %vm1097 = vcmask 7168
      %1098 = vst.msk [vmem:[%s257] sm:$0xff] %vm1097, %v1096
      %v1099 = vmul.f32 %v1089, %v1089
      %v1100 = vmul.f32 %v1090, %v1090
      %v1101 = vmul.f32 %v1091, %v1091
      %v1102 = vadd.f32 %v1099, %v1100
      %v1103 = vsel %vm1079, %v1101, 0.0
      %v1104 = vadd.f32 %v1102, %v1103
      %1105 = vadd.xlane.f32.xlu0 %v1104
      %v1106 = vpop.xlane.xlu0 %1105
      %s1107 = scalar_lea.vmem %s257, 8
      %1108 = vst.msk [vmem:[%s1107] sm:$0xff] %vm1097, %v1106
      %p1109 = scmp.lt.s32.totalorder %s20, 1
      %s1110 = scalar_select %p1109, %s20, 1
      %p1111 = scmp.lt.s32.totalorder %s21, 0
      %s1112 = scalar_select %p1111, %s21, 0
      %s1113 = smul.addr %s1112, 3
      %s1114 = smul.addr %s1110, 3
      %s1115 = sadd.s32 %s1113, %s1114
      %s1116 = smul.addr %s1115, 8
      %s1117 = scalar_lea.vmem %s3, %s1116
      %p1118 = scmp.lt.s32.totalorder %s20, 1
      %s1119 = scalar_select %p1118, %s20, 1
      %p1120 = scmp.lt.s32.totalorder %s21, 0
      %s1121 = scalar_select %p1120, %s21, 0
      %s1122 = smul.addr %s1119, 2
      %s1123 = sadd.s32 %s1121, %s1122
      %s1124 = smul.addr %s1123, 8
      %s1125 = scalar_lea.vmem %s4, %s1124
      // Predicated region
      $region33: #{conv_block.2} parent=31 // pred_check
        %p1126 = pneg %p121
      $region34: #{conv_block.2} parent=31 // pred_check_branch
        %1128 = sbr.rel (%p1126) target = $region36
      $region35: #{conv_block.2} parent=31 // pred_region
        _
      $region36: #{conv_block.2} parent=31 // pred_fallthru
        _
      // Predicated region
      $region37: #{conv_block.2} parent=31 // pred_check
        %p1129 = pneg %p149
      $region38: #{conv_block.2} parent=31 // pred_check_branch
        %1131 = sbr.rel (%p1129) target = $region40
      $region39: #{conv_block.2} parent=31 // pred_region
        _
      $region40: #{conv_block.2} parent=31 // pred_fallthru
        _
    $region32: #{conv_block.2} parent=5 // pred_fallthru
      _
    %p1132 = scmp.le.s32.totalorder 2, %s11
    // Predicated region
    $region41: #{conv_block.2} parent=5 // pred_check
      %p1133 = pneg %p1132
    $region42: #{conv_block.2} parent=5 // pred_check_branch
      %1135 = sbr.rel (%p1133) target = $region44
    $region43: #{conv_block.2} parent=5 // pred_region
      %s1136 = ssub.s32 %s11, 2
      // Predicated region
      $region45: #{conv_block.2} parent=43 // pred_check
        %p1137 = pneg %p127
      $region46: #{conv_block.2} parent=43 // pred_check_branch
        %1139 = sbr.rel (%p1137) target = $region48
      $region47: #{conv_block.2} parent=43 // pred_region
        %p1140 = scmp.lt.s32.totalorder %s22, 1
        %s1141 = scalar_select %p1140, %s22, 1
        %p1142 = scmp.lt.s32.totalorder %s23, 0
        %s1143 = scalar_select %p1142, %s23, 0
        %s1144 = smul.addr %s1143, 3
        %s1145 = smul.addr %s1141, 3
        %s1146 = sadd.s32 %s1144, %s1145
        %s1147 = smul.addr %s1146, 8
        %s1148 = scalar_lea.vmem %s3, %s1147
      $region48: #{conv_block.2} parent=43 // pred_fallthru
        _
      // Predicated region
      $region49: #{conv_block.2} parent=43 // pred_check
        %p1149 = pneg %p155
      $region50: #{conv_block.2} parent=43 // pred_check_branch
        %1151 = sbr.rel (%p1149) target = $region52
      $region51: #{conv_block.2} parent=43 // pred_region
        %p1152 = scmp.lt.s32.totalorder %s22, 1
        %s1153 = scalar_select %p1152, %s22, 1
        %p1154 = scmp.lt.s32.totalorder %s23, 0
        %s1155 = scalar_select %p1154, %s23, 0
        %s1156 = smul.addr %s1153, 2
        %s1157 = sadd.s32 %s1155, %s1156
        %s1158 = smul.addr %s1157, 8
        %s1159 = scalar_lea.vmem %s4, %s1158
      $region52: #{conv_block.2} parent=43 // pred_fallthru
        _
    $region44: #{conv_block.2} parent=5 // pred_fallthru
      _
  $region6: #{conv_block.2} parent=0 // loop_footer
    %s15 = sadd.s32 1, %s11
  $region7: #{conv_block.2} parent=0 // loop_footer_branch
    %10 = sbr.rel target = $region3
  $region8: #{conv_block.2} parent=0 // loop_exit
    _

</llo_original>
